<compile_context>
chip_gen: v7x
topology: tpu7x:2x2x1
jax: 0.10.0
libtpu: 0.0.40
codegen_flags: <defaults>
</compile_context>

<pallas_src>
import functools

import jax
import jax.numpy as jnp
from jax import lax
from jax.experimental import pallas as pl
from jax.experimental.pallas import tpu as pltpu

# Small, forward-implied sizes.
EMBED = 32    # embedding_dim
HIDDEN = 32   # hidden_dim
VOCAB = 16    # vocab_size
TAGS = 8      # tagset_size
SEQ = 8       # sentence length


def tagger_kernel(B, sent_ref, table_ref, w_hh_ref, b_hh_n_ref,
                  w_tag_ref, b_tag_ref, out_ref):
    """sent:(S*B,1) i32 (step-major)  table:(V,3H)  w_hh:(H,3H)  b_hh_n:(1,H)
       w_tag:(H,T)  b_tag:(1,T)  out:(S*B,T) (step-major)"""
    H = HIDDEN
    S = SEQ  # compile-time constant

    # ---- Fused embedding lookup + input-side GRU projection ----------------
    # One-hot gather on the MXU; the table already contains
    # emb @ W_ih^T + b_ih + [b_hh_r, b_hh_z, 0] (parameter-only precompute).
    # NOTE: out-of-range token ids yield an all-zero row (zero gate input)
    # instead of raising like torch.nn.Embedding.
    idx = sent_ref[...]                                          # (S*B, 1) int32
    iota = lax.broadcasted_iota(jnp.int32, (S * B, VOCAB), 1)    # (S*B, V)
    one_hot = (iota == idx).astype(jnp.float32)                  # (S*B, V)
    gi_all = jnp.dot(one_hot, table_ref[...],
                     preferred_element_type=jnp.float32)         # (S*B, 3H)

    w_hh = w_hh_ref[...]                                         # (H, 3H)
    b_hh_n = b_hh_n_ref[...]                                     # (1, H)

    # ---- Unrolled GRU recurrence (hidden state lives in registers) ---------
    h = jnp.zeros((B, H), jnp.float32)
    h_rows = []
    for t in range(S):
        gi_t = gi_all[t * B:(t + 1) * B, :]                      # (B, 3H) static slice
        gh = jnp.dot(h, w_hh, preferred_element_type=jnp.float32)  # (B, 3H)
        # Single 2H-wide sigmoid for r and z (one EUP push per step).
        rz = jax.nn.sigmoid(gi_t[:, :2 * H] + gh[:, :2 * H])     # (B, 2H)
        r = rz[:, :H]
        z = rz[:, H:]
        n = jnp.tanh(gi_t[:, 2 * H:] + r * (gh[:, 2 * H:] + b_hh_n))
        h = (1.0 - z) * n + z * h
        h_rows.append(h)
    hseq = jnp.concatenate(h_rows, axis=0)                       # (S*B, H) step-major

    # ---- hidden2tag linear + log_softmax over the tag dimension ------------
    # TODO(synk): for B in the hundreds (v6e), repack the output lane-dense
    #   (last dim a multiple of 128) to avoid masked vst.msk partial stores.
    logits = jnp.dot(hseq, w_tag_ref[...],
                     preferred_element_type=jnp.float32) + b_tag_ref[...]
    m = jnp.max(logits, axis=-1, keepdims=True)
    lse = m + jnp.log(jnp.sum(jnp.exp(logits - m), axis=-1, keepdims=True))
    out_ref[...] = logits - lse


def prepare_kernel_params(params):
    """Parameter-only precompute (done once per parameter set, not per call)."""
    H = HIDDEN
    b_hh = params["b_hh"]                                        # (1, 3H)
    # Fold b_ih fully and the r/z halves of b_hh into the gather table; the
    # n-gate hidden bias must stay inside r * (gh_n + b_hn) per torch GRUCell.
    bias_rz = jnp.concatenate(
        [b_hh[:, :2 * H], jnp.zeros((1, H), jnp.float32)], axis=-1)
    gi_table = (params["embedding"] @ params["w_ih_t"]
                + params["b_ih"] + bias_rz)                      # (V, 3H)
    return {
        "gi_table": gi_table,
        "w_hh_t": params["w_hh_t"],
        "b_hh_n": b_hh[:, 2 * H:],
        "w_tag_t": params["w_tag_t"],
        "b_tag": params["b_tag"],
    }


def tagger_forward_batch(sentences, kparams):
    """sentences: (B, S) int32 -> (B, S, TAGS) f32 log-probs."""
    B, S = sentences.shape
    assert S == SEQ
    # Step-major token layout: row t*B+b holds token t of sentence b, so each
    # per-step kernel slice is a contiguous, B-row-aligned sublane block.
    sent_flat = sentences.astype(jnp.int32).T.reshape(S * B, 1)

    vmem = pl.BlockSpec(memory_space=pltpu.MemorySpace.VMEM)
    out = pl.pallas_call(
        functools.partial(tagger_kernel, B),
        out_shape=jax.ShapeDtypeStruct((S * B, TAGS), jnp.float32),
        in_specs=[vmem] * 6,
        out_specs=vmem,
    )(sent_flat,
      kparams["gi_table"], kparams["w_hh_t"], kparams["b_hh_n"],
      kparams["w_tag_t"], kparams["b_tag"])
    return out.reshape(S, B, TAGS).transpose(1, 0, 2)            # (B, S, T)


def tagger_forward(sentence, kparams):
    """Single-sentence path matching the original module signature."""
    return tagger_forward_batch(sentence.reshape(1, -1), kparams)[0]


def init_params(key):
    ks = jax.random.split(key, 7)
    scale = 0.1
    return {
        # nn.Embedding(vocab_size, embedding_dim)
        "embedding": scale * jax.random.normal(ks[0], (VOCAB, EMBED), jnp.float32),
        # nn.GRUCell(embedding_dim, hidden_dim): weight_ih (3H, E) stored transposed
        "w_ih_t": scale * jax.random.normal(ks[1], (EMBED, 3 * HIDDEN), jnp.float32),
        "b_ih": scale * jax.random.normal(ks[2], (1, 3 * HIDDEN), jnp.float32),
        # weight_hh (3H, H) stored transposed
        "w_hh_t": scale * jax.random.normal(ks[3], (HIDDEN, 3 * HIDDEN), jnp.float32),
        "b_hh": scale * jax.random.normal(ks[4], (1, 3 * HIDDEN), jnp.float32),
        # nn.Linear(hidden_dim, tagset_size): weight (T, H) stored transposed
        "w_tag_t": scale * jax.random.normal(ks[5], (HIDDEN, TAGS), jnp.float32),
        "b_tag": scale * jax.random.normal(ks[6], (1, TAGS), jnp.float32),
    }


def _reference_forward(sentence, params):
    """Pure-JAX reference of the PyTorch forward (for correctness check)."""
    H = HIDDEN
    embeds = jnp.take(params["embedding"], sentence, axis=0)      # (S, E)
    h = jnp.zeros((1, H), jnp.float32)
    outs = []
    for t in range(sentence.shape[0]):
        x = embeds[t:t + 1, :]
        gi = x @ params["w_ih_t"] + params["b_ih"]
        gh = h @ params["w_hh_t"] + params["b_hh"]
        r = jax.nn.sigmoid(gi[:, :H] + gh[:, :H])
        z = jax.nn.sigmoid(gi[:, H:2 * H] + gh[:, H:2 * H])
        n = jnp.tanh(gi[:, 2 * H:] + r * gh[:, 2 * H:])
        h = (1.0 - z) * n + z * h
        outs.append(h)
    hseq = jnp.concatenate(outs, axis=0)
    logits = hseq @ params["w_tag_t"] + params["b_tag"]
    return jax.nn.log_softmax(logits, axis=-1)


if __name__ == "__main__":
    key = jax.random.PRNGKey(0)
    pkey, skey = jax.random.split(key)
    params = init_params(pkey)
    kparams = prepare_kernel_params(params)

    B = 8
    sentences = jax.random.randint(skey, (B, SEQ), 0, VOCAB, dtype=jnp.int32)

    # Batched kernel call (amortizes dispatch + serial recurrence across B).
    scores = tagger_forward_batch(sentences, kparams)
    scores = jax.block_until_ready(scores)

    assert scores.shape == (B, SEQ, TAGS)
    assert scores.dtype == jnp.float32
    # log_softmax rows must exp-sum to ~1
    assert jnp.allclose(jnp.sum(jnp.exp(scores), axis=-1), 1.0, atol=1e-4)
    # each batch row must match the pure-JAX reference of the torch module
    # (table precompute reassociates f32 adds, hence the slightly looser tol)
    for b in range(B):
        ref = _reference_forward(sentences[b], params)
        err = float(jnp.max(jnp.abs(scores[b] - ref)))
        assert jnp.allclose(scores[b], ref, atol=1e-4), (b, err)

    # single-sentence path (original module signature) agrees with batched path
    single = tagger_forward(sentences[0], kparams)
    single = jax.block_until_ready(single)
    assert single.shape == (SEQ, TAGS)
    assert jnp.allclose(single, scores[0], atol=1e-5)

    print("KERNEL_OK")
</pallas_src>

<mosaic_0001>
module attributes {stable_mosaic.version = 11 : i64} {
  func.func @tagger_kernel(%arg0: memref<64x1xi32, #tpu.memory_space<vmem>>, %arg1: memref<16x96xf32, #tpu.memory_space<vmem>>, %arg2: memref<32x96xf32, #tpu.memory_space<vmem>>, %arg3: memref<1x32xf32, #tpu.memory_space<vmem>>, %arg4: memref<32x8xf32, #tpu.memory_space<vmem>>, %arg5: memref<1x8xf32, #tpu.memory_space<vmem>>, %arg6: memref<64x8xf32, #tpu.memory_space<vmem>>) attributes {dimension_semantics = [], scalar_prefetch = 0 : i64, scratch_operands = 0 : i64, tpu.core_type = #tpu.core_type<tc>} {
    %c0 = arith.constant 0 : index
    %c0_0 = arith.constant 0 : index
    %0 = vector.load %arg0[%c0, %c0_0] : memref<64x1xi32, #tpu.memory_space<vmem>>, vector<64x1xi32>
    %1 = tpu.iota {dimensions = array<i32: 1>} : vector<64x16xi32>
    %2 = vector.broadcast %0 : vector<64x1xi32> to vector<64x16xi32>
    %3 = arith.cmpi eq, %1, %2 : vector<64x16xi32>
    %4 = arith.extui %3 : vector<64x16xi1> to vector<64x16xi32>
    %5 = arith.sitofp %4 : vector<64x16xi32> to vector<64x16xf32>
    %c0_1 = arith.constant 0 : index
    %c0_2 = arith.constant 0 : index
    %6 = vector.load %arg1[%c0_1, %c0_2] : memref<16x96xf32, #tpu.memory_space<vmem>>, vector<16x96xf32>
    %cst = arith.constant dense<0.000000e+00> : vector<64x96xf32>
    %7 = tpu.matmul %5, %6, %cst {dimension_numbers = #tpu.dot_dimension_numbers<[1], [0], [0], [1], [0, 0, 1, 1], [], []>} : vector<64x16xf32>, vector<16x96xf32>, vector<64x96xf32> -> vector<64x96xf32>
    %c0_3 = arith.constant 0 : index
    %c0_4 = arith.constant 0 : index
    %8 = vector.load %arg2[%c0_3, %c0_4] : memref<32x96xf32, #tpu.memory_space<vmem>>, vector<32x96xf32>
    %c0_5 = arith.constant 0 : index
    %c0_6 = arith.constant 0 : index
    %9 = vector.load %arg3[%c0_5, %c0_6] : memref<1x32xf32, #tpu.memory_space<vmem>>, vector<1x32xf32>
    %cst_7 = arith.constant 0.000000e+00 : f32
    %10 = vector.broadcast %cst_7 : f32 to vector<8x32xf32>
    %11 = vector.extract_strided_slice %7 {offsets = [0, 0], sizes = [8, 96], strides = [1, 1]} : vector<64x96xf32> to vector<8x96xf32>
    %cst_8 = arith.constant dense<0.000000e+00> : vector<8x96xf32>
    %12 = tpu.matmul %10, %8, %cst_8 {dimension_numbers = #tpu.dot_dimension_numbers<[1], [0], [0], [1], [0, 0, 1, 1], [], []>} : vector<8x32xf32>, vector<32x96xf32>, vector<8x96xf32> -> vector<8x96xf32>
    %13 = vector.extract_strided_slice %11 {offsets = [0, 0], sizes = [8, 64], strides = [1, 1]} : vector<8x96xf32> to vector<8x64xf32>
    %14 = vector.extract_strided_slice %12 {offsets = [0, 0], sizes = [8, 64], strides = [1, 1]} : vector<8x96xf32> to vector<8x64xf32>
    %15 = arith.addf %13, %14 : vector<8x64xf32>
    %16 = arith.negf %15 : vector<8x64xf32>
    %17 = math.exp %16 : vector<8x64xf32>
    %cst_9 = arith.constant 1.000000e+00 : f32
    %18 = vector.broadcast %cst_9 : f32 to vector<8x64xf32>
    %19 = arith.addf %18, %17 : vector<8x64xf32>
    %20 = arith.divf %18, %19 : vector<8x64xf32>
    %21 = vector.extract_strided_slice %20 {offsets = [0, 0], sizes = [8, 32], strides = [1, 1]} : vector<8x64xf32> to vector<8x32xf32>
    %22 = vector.extract_strided_slice %20 {offsets = [0, 32], sizes = [8, 32], strides = [1, 1]} : vector<8x64xf32> to vector<8x32xf32>
    %23 = vector.extract_strided_slice %11 {offsets = [0, 64], sizes = [8, 32], strides = [1, 1]} : vector<8x96xf32> to vector<8x32xf32>
    %24 = vector.extract_strided_slice %12 {offsets = [0, 64], sizes = [8, 32], strides = [1, 1]} : vector<8x96xf32> to vector<8x32xf32>
    %25 = vector.broadcast %9 : vector<1x32xf32> to vector<8x32xf32>
    %26 = arith.addf %24, %25 : vector<8x32xf32>
    %27 = arith.mulf %21, %26 : vector<8x32xf32>
    %28 = arith.addf %23, %27 : vector<8x32xf32>
    %29 = math.tanh %28 : vector<8x32xf32>
    %cst_10 = arith.constant 1.000000e+00 : f32
    %30 = vector.broadcast %cst_10 : f32 to vector<8x32xf32>
    %31 = arith.subf %30, %22 : vector<8x32xf32>
    %32 = arith.mulf %31, %29 : vector<8x32xf32>
    %33 = arith.mulf %22, %10 : vector<8x32xf32>
    %34 = arith.addf %32, %33 : vector<8x32xf32>
    %35 = vector.extract_strided_slice %7 {offsets = [8, 0], sizes = [8, 96], strides = [1, 1]} : vector<64x96xf32> to vector<8x96xf32>
    %cst_11 = arith.constant dense<0.000000e+00> : vector<8x96xf32>
    %36 = tpu.matmul %34, %8, %cst_11 {dimension_numbers = #tpu.dot_dimension_numbers<[1], [0], [0], [1], [0, 0, 1, 1], [], []>} : vector<8x32xf32>, vector<32x96xf32>, vector<8x96xf32> -> vector<8x96xf32>
    %37 = vector.extract_strided_slice %35 {offsets = [0, 0], sizes = [8, 64], strides = [1, 1]} : vector<8x96xf32> to vector<8x64xf32>
    %38 = vector.extract_strided_slice %36 {offsets = [0, 0], sizes = [8, 64], strides = [1, 1]} : vector<8x96xf32> to vector<8x64xf32>
    %39 = arith.addf %37, %38 : vector<8x64xf32>
    %40 = arith.negf %39 : vector<8x64xf32>
    %41 = math.exp %40 : vector<8x64xf32>
    %cst_12 = arith.constant 1.000000e+00 : f32
    %42 = vector.broadcast %cst_12 : f32 to vector<8x64xf32>
    %43 = arith.addf %42, %41 : vector<8x64xf32>
    %44 = arith.divf %42, %43 : vector<8x64xf32>
    %45 = vector.extract_strided_slice %44 {offsets = [0, 0], sizes = [8, 32], strides = [1, 1]} : vector<8x64xf32> to vector<8x32xf32>
    %46 = vector.extract_strided_slice %44 {offsets = [0, 32], sizes = [8, 32], strides = [1, 1]} : vector<8x64xf32> to vector<8x32xf32>
    %47 = vector.extract_strided_slice %35 {offsets = [0, 64], sizes = [8, 32], strides = [1, 1]} : vector<8x96xf32> to vector<8x32xf32>
    %48 = vector.extract_strided_slice %36 {offsets = [0, 64], sizes = [8, 32], strides = [1, 1]} : vector<8x96xf32> to vector<8x32xf32>
    %49 = vector.broadcast %9 : vector<1x32xf32> to vector<8x32xf32>
    %50 = arith.addf %48, %49 : vector<8x32xf32>
    %51 = arith.mulf %45, %50 : vector<8x32xf32>
    %52 = arith.addf %47, %51 : vector<8x32xf32>
    %53 = math.tanh %52 : vector<8x32xf32>
    %cst_13 = arith.constant 1.000000e+00 : f32
    %54 = vector.broadcast %cst_13 : f32 to vector<8x32xf32>
    %55 = arith.subf %54, %46 : vector<8x32xf32>
    %56 = arith.mulf %55, %53 : vector<8x32xf32>
    %57 = arith.mulf %46, %34 : vector<8x32xf32>
    %58 = arith.addf %56, %57 : vector<8x32xf32>
    %59 = vector.extract_strided_slice %7 {offsets = [16, 0], sizes = [8, 96], strides = [1, 1]} : vector<64x96xf32> to vector<8x96xf32>
    %cst_14 = arith.constant dense<0.000000e+00> : vector<8x96xf32>
    %60 = tpu.matmul %58, %8, %cst_14 {dimension_numbers = #tpu.dot_dimension_numbers<[1], [0], [0], [1], [0, 0, 1, 1], [], []>} : vector<8x32xf32>, vector<32x96xf32>, vector<8x96xf32> -> vector<8x96xf32>
    %61 = vector.extract_strided_slice %59 {offsets = [0, 0], sizes = [8, 64], strides = [1, 1]} : vector<8x96xf32> to vector<8x64xf32>
    %62 = vector.extract_strided_slice %60 {offsets = [0, 0], sizes = [8, 64], strides = [1, 1]} : vector<8x96xf32> to vector<8x64xf32>
    %63 = arith.addf %61, %62 : vector<8x64xf32>
    %64 = arith.negf %63 : vector<8x64xf32>
    %65 = math.exp %64 : vector<8x64xf32>
    %cst_15 = arith.constant 1.000000e+00 : f32
    %66 = vector.broadcast %cst_15 : f32 to vector<8x64xf32>
    %67 = arith.addf %66, %65 : vector<8x64xf32>
    %68 = arith.divf %66, %67 : vector<8x64xf32>
    %69 = vector.extract_strided_slice %68 {offsets = [0, 0], sizes = [8, 32], strides = [1, 1]} : vector<8x64xf32> to vector<8x32xf32>
    %70 = vector.extract_strided_slice %68 {offsets = [0, 32], sizes = [8, 32], strides = [1, 1]} : vector<8x64xf32> to vector<8x32xf32>
    %71 = vector.extract_strided_slice %59 {offsets = [0, 64], sizes = [8, 32], strides = [1, 1]} : vector<8x96xf32> to vector<8x32xf32>
    %72 = vector.extract_strided_slice %60 {offsets = [0, 64], sizes = [8, 32], strides = [1, 1]} : vector<8x96xf32> to vector<8x32xf32>
    %73 = vector.broadcast %9 : vector<1x32xf32> to vector<8x32xf32>
    %74 = arith.addf %72, %73 : vector<8x32xf32>
    %75 = arith.mulf %69, %74 : vector<8x32xf32>
    %76 = arith.addf %71, %75 : vector<8x32xf32>
    %77 = math.tanh %76 : vector<8x32xf32>
    %cst_16 = arith.constant 1.000000e+00 : f32
    %78 = vector.broadcast %cst_16 : f32 to vector<8x32xf32>
    %79 = arith.subf %78, %70 : vector<8x32xf32>
    %80 = arith.mulf %79, %77 : vector<8x32xf32>
    %81 = arith.mulf %70, %58 : vector<8x32xf32>
    %82 = arith.addf %80, %81 : vector<8x32xf32>
    %83 = vector.extract_strided_slice %7 {offsets = [24, 0], sizes = [8, 96], strides = [1, 1]} : vector<64x96xf32> to vector<8x96xf32>
    %cst_17 = arith.constant dense<0.000000e+00> : vector<8x96xf32>
    %84 = tpu.matmul %82, %8, %cst_17 {dimension_numbers = #tpu.dot_dimension_numbers<[1], [0], [0], [1], [0, 0, 1, 1], [], []>} : vector<8x32xf32>, vector<32x96xf32>, vector<8x96xf32> -> vector<8x96xf32>
    %85 = vector.extract_strided_slice %83 {offsets = [0, 0], sizes = [8, 64], strides = [1, 1]} : vector<8x96xf32> to vector<8x64xf32>
    %86 = vector.extract_strided_slice %84 {offsets = [0, 0], sizes = [8, 64], strides = [1, 1]} : vector<8x96xf32> to vector<8x64xf32>
    %87 = arith.addf %85, %86 : vector<8x64xf32>
    %88 = arith.negf %87 : vector<8x64xf32>
    %89 = math.exp %88 : vector<8x64xf32>
    %cst_18 = arith.constant 1.000000e+00 : f32
    %90 = vector.broadcast %cst_18 : f32 to vector<8x64xf32>
    %91 = arith.addf %90, %89 : vector<8x64xf32>
    %92 = arith.divf %90, %91 : vector<8x64xf32>
    %93 = vector.extract_strided_slice %92 {offsets = [0, 0], sizes = [8, 32], strides = [1, 1]} : vector<8x64xf32> to vector<8x32xf32>
    %94 = vector.extract_strided_slice %92 {offsets = [0, 32], sizes = [8, 32], strides = [1, 1]} : vector<8x64xf32> to vector<8x32xf32>
    %95 = vector.extract_strided_slice %83 {offsets = [0, 64], sizes = [8, 32], strides = [1, 1]} : vector<8x96xf32> to vector<8x32xf32>
    %96 = vector.extract_strided_slice %84 {offsets = [0, 64], sizes = [8, 32], strides = [1, 1]} : vector<8x96xf32> to vector<8x32xf32>
    %97 = vector.broadcast %9 : vector<1x32xf32> to vector<8x32xf32>
    %98 = arith.addf %96, %97 : vector<8x32xf32>
    %99 = arith.mulf %93, %98 : vector<8x32xf32>
    %100 = arith.addf %95, %99 : vector<8x32xf32>
    %101 = math.tanh %100 : vector<8x32xf32>
    %cst_19 = arith.constant 1.000000e+00 : f32
    %102 = vector.broadcast %cst_19 : f32 to vector<8x32xf32>
    %103 = arith.subf %102, %94 : vector<8x32xf32>
    %104 = arith.mulf %103, %101 : vector<8x32xf32>
    %105 = arith.mulf %94, %82 : vector<8x32xf32>
    %106 = arith.addf %104, %105 : vector<8x32xf32>
    %107 = vector.extract_strided_slice %7 {offsets = [32, 0], sizes = [8, 96], strides = [1, 1]} : vector<64x96xf32> to vector<8x96xf32>
    %cst_20 = arith.constant dense<0.000000e+00> : vector<8x96xf32>
    %108 = tpu.matmul %106, %8, %cst_20 {dimension_numbers = #tpu.dot_dimension_numbers<[1], [0], [0], [1], [0, 0, 1, 1], [], []>} : vector<8x32xf32>, vector<32x96xf32>, vector<8x96xf32> -> vector<8x96xf32>
    %109 = vector.extract_strided_slice %107 {offsets = [0, 0], sizes = [8, 64], strides = [1, 1]} : vector<8x96xf32> to vector<8x64xf32>
    %110 = vector.extract_strided_slice %108 {offsets = [0, 0], sizes = [8, 64], strides = [1, 1]} : vector<8x96xf32> to vector<8x64xf32>
    %111 = arith.addf %109, %110 : vector<8x64xf32>
    %112 = arith.negf %111 : vector<8x64xf32>
    %113 = math.exp %112 : vector<8x64xf32>
    %cst_21 = arith.constant 1.000000e+00 : f32
    %114 = vector.broadcast %cst_21 : f32 to vector<8x64xf32>
    %115 = arith.addf %114, %113 : vector<8x64xf32>
    %116 = arith.divf %114, %115 : vector<8x64xf32>
    %117 = vector.extract_strided_slice %116 {offsets = [0, 0], sizes = [8, 32], strides = [1, 1]} : vector<8x64xf32> to vector<8x32xf32>
    %118 = vector.extract_strided_slice %116 {offsets = [0, 32], sizes = [8, 32], strides = [1, 1]} : vector<8x64xf32> to vector<8x32xf32>
    %119 = vector.extract_strided_slice %107 {offsets = [0, 64], sizes = [8, 32], strides = [1, 1]} : vector<8x96xf32> to vector<8x32xf32>
    %120 = vector.extract_strided_slice %108 {offsets = [0, 64], sizes = [8, 32], strides = [1, 1]} : vector<8x96xf32> to vector<8x32xf32>
    %121 = vector.broadcast %9 : vector<1x32xf32> to vector<8x32xf32>
    %122 = arith.addf %120, %121 : vector<8x32xf32>
    %123 = arith.mulf %117, %122 : vector<8x32xf32>
    %124 = arith.addf %119, %123 : vector<8x32xf32>
    %125 = math.tanh %124 : vector<8x32xf32>
    %cst_22 = arith.constant 1.000000e+00 : f32
    %126 = vector.broadcast %cst_22 : f32 to vector<8x32xf32>
    %127 = arith.subf %126, %118 : vector<8x32xf32>
    %128 = arith.mulf %127, %125 : vector<8x32xf32>
    %129 = arith.mulf %118, %106 : vector<8x32xf32>
    %130 = arith.addf %128, %129 : vector<8x32xf32>
    %131 = vector.extract_strided_slice %7 {offsets = [40, 0], sizes = [8, 96], strides = [1, 1]} : vector<64x96xf32> to vector<8x96xf32>
    %cst_23 = arith.constant dense<0.000000e+00> : vector<8x96xf32>
    %132 = tpu.matmul %130, %8, %cst_23 {dimension_numbers = #tpu.dot_dimension_numbers<[1], [0], [0], [1], [0, 0, 1, 1], [], []>} : vector<8x32xf32>, vector<32x96xf32>, vector<8x96xf32> -> vector<8x96xf32>
    %133 = vector.extract_strided_slice %131 {offsets = [0, 0], sizes = [8, 64], strides = [1, 1]} : vector<8x96xf32> to vector<8x64xf32>
    %134 = vector.extract_strided_slice %132 {offsets = [0, 0], sizes = [8, 64], strides = [1, 1]} : vector<8x96xf32> to vector<8x64xf32>
    %135 = arith.addf %133, %134 : vector<8x64xf32>
    %136 = arith.negf %135 : vector<8x64xf32>
    %137 = math.exp %136 : vector<8x64xf32>
    %cst_24 = arith.constant 1.000000e+00 : f32
    %138 = vector.broadcast %cst_24 : f32 to vector<8x64xf32>
    %139 = arith.addf %138, %137 : vector<8x64xf32>
    %140 = arith.divf %138, %139 : vector<8x64xf32>
    %141 = vector.extract_strided_slice %140 {offsets = [0, 0], sizes = [8, 32], strides = [1, 1]} : vector<8x64xf32> to vector<8x32xf32>
    %142 = vector.extract_strided_slice %140 {offsets = [0, 32], sizes = [8, 32], strides = [1, 1]} : vector<8x64xf32> to vector<8x32xf32>
    %143 = vector.extract_strided_slice %131 {offsets = [0, 64], sizes = [8, 32], strides = [1, 1]} : vector<8x96xf32> to vector<8x32xf32>
    %144 = vector.extract_strided_slice %132 {offsets = [0, 64], sizes = [8, 32], strides = [1, 1]} : vector<8x96xf32> to vector<8x32xf32>
    %145 = vector.broadcast %9 : vector<1x32xf32> to vector<8x32xf32>
    %146 = arith.addf %144, %145 : vector<8x32xf32>
    %147 = arith.mulf %141, %146 : vector<8x32xf32>
    %148 = arith.addf %143, %147 : vector<8x32xf32>
    %149 = math.tanh %148 : vector<8x32xf32>
    %cst_25 = arith.constant 1.000000e+00 : f32
    %150 = vector.broadcast %cst_25 : f32 to vector<8x32xf32>
    %151 = arith.subf %150, %142 : vector<8x32xf32>
    %152 = arith.mulf %151, %149 : vector<8x32xf32>
    %153 = arith.mulf %142, %130 : vector<8x32xf32>
    %154 = arith.addf %152, %153 : vector<8x32xf32>
    %155 = vector.extract_strided_slice %7 {offsets = [48, 0], sizes = [8, 96], strides = [1, 1]} : vector<64x96xf32> to vector<8x96xf32>
    %cst_26 = arith.constant dense<0.000000e+00> : vector<8x96xf32>
    %156 = tpu.matmul %154, %8, %cst_26 {dimension_numbers = #tpu.dot_dimension_numbers<[1], [0], [0], [1], [0, 0, 1, 1], [], []>} : vector<8x32xf32>, vector<32x96xf32>, vector<8x96xf32> -> vector<8x96xf32>
    %157 = vector.extract_strided_slice %155 {offsets = [0, 0], sizes = [8, 64], strides = [1, 1]} : vector<8x96xf32> to vector<8x64xf32>
    %158 = vector.extract_strided_slice %156 {offsets = [0, 0], sizes = [8, 64], strides = [1, 1]} : vector<8x96xf32> to vector<8x64xf32>
    %159 = arith.addf %157, %158 : vector<8x64xf32>
    %160 = arith.negf %159 : vector<8x64xf32>
    %161 = math.exp %160 : vector<8x64xf32>
    %cst_27 = arith.constant 1.000000e+00 : f32
    %162 = vector.broadcast %cst_27 : f32 to vector<8x64xf32>
    %163 = arith.addf %162, %161 : vector<8x64xf32>
    %164 = arith.divf %162, %163 : vector<8x64xf32>
    %165 = vector.extract_strided_slice %164 {offsets = [0, 0], sizes = [8, 32], strides = [1, 1]} : vector<8x64xf32> to vector<8x32xf32>
    %166 = vector.extract_strided_slice %164 {offsets = [0, 32], sizes = [8, 32], strides = [1, 1]} : vector<8x64xf32> to vector<8x32xf32>
    %167 = vector.extract_strided_slice %155 {offsets = [0, 64], sizes = [8, 32], strides = [1, 1]} : vector<8x96xf32> to vector<8x32xf32>
    %168 = vector.extract_strided_slice %156 {offsets = [0, 64], sizes = [8, 32], strides = [1, 1]} : vector<8x96xf32> to vector<8x32xf32>
    %169 = vector.broadcast %9 : vector<1x32xf32> to vector<8x32xf32>
    %170 = arith.addf %168, %169 : vector<8x32xf32>
    %171 = arith.mulf %165, %170 : vector<8x32xf32>
    %172 = arith.addf %167, %171 : vector<8x32xf32>
    %173 = math.tanh %172 : vector<8x32xf32>
    %cst_28 = arith.constant 1.000000e+00 : f32
    %174 = vector.broadcast %cst_28 : f32 to vector<8x32xf32>
    %175 = arith.subf %174, %166 : vector<8x32xf32>
    %176 = arith.mulf %175, %173 : vector<8x32xf32>
    %177 = arith.mulf %166, %154 : vector<8x32xf32>
    %178 = arith.addf %176, %177 : vector<8x32xf32>
    %179 = vector.extract_strided_slice %7 {offsets = [56, 0], sizes = [8, 96], strides = [1, 1]} : vector<64x96xf32> to vector<8x96xf32>
    %cst_29 = arith.constant dense<0.000000e+00> : vector<8x96xf32>
    %180 = tpu.matmul %178, %8, %cst_29 {dimension_numbers = #tpu.dot_dimension_numbers<[1], [0], [0], [1], [0, 0, 1, 1], [], []>} : vector<8x32xf32>, vector<32x96xf32>, vector<8x96xf32> -> vector<8x96xf32>
    %181 = vector.extract_strided_slice %179 {offsets = [0, 0], sizes = [8, 64], strides = [1, 1]} : vector<8x96xf32> to vector<8x64xf32>
    %182 = vector.extract_strided_slice %180 {offsets = [0, 0], sizes = [8, 64], strides = [1, 1]} : vector<8x96xf32> to vector<8x64xf32>
    %183 = arith.addf %181, %182 : vector<8x64xf32>
    %184 = arith.negf %183 : vector<8x64xf32>
    %185 = math.exp %184 : vector<8x64xf32>
    %cst_30 = arith.constant 1.000000e+00 : f32
    %186 = vector.broadcast %cst_30 : f32 to vector<8x64xf32>
    %187 = arith.addf %186, %185 : vector<8x64xf32>
    %188 = arith.divf %186, %187 : vector<8x64xf32>
    %189 = vector.extract_strided_slice %188 {offsets = [0, 0], sizes = [8, 32], strides = [1, 1]} : vector<8x64xf32> to vector<8x32xf32>
    %190 = vector.extract_strided_slice %188 {offsets = [0, 32], sizes = [8, 32], strides = [1, 1]} : vector<8x64xf32> to vector<8x32xf32>
    %191 = vector.extract_strided_slice %179 {offsets = [0, 64], sizes = [8, 32], strides = [1, 1]} : vector<8x96xf32> to vector<8x32xf32>
    %192 = vector.extract_strided_slice %180 {offsets = [0, 64], sizes = [8, 32], strides = [1, 1]} : vector<8x96xf32> to vector<8x32xf32>
    %193 = vector.broadcast %9 : vector<1x32xf32> to vector<8x32xf32>
    %194 = arith.addf %192, %193 : vector<8x32xf32>
    %195 = arith.mulf %189, %194 : vector<8x32xf32>
    %196 = arith.addf %191, %195 : vector<8x32xf32>
    %197 = math.tanh %196 : vector<8x32xf32>
    %cst_31 = arith.constant 1.000000e+00 : f32
    %198 = vector.broadcast %cst_31 : f32 to vector<8x32xf32>
    %199 = arith.subf %198, %190 : vector<8x32xf32>
    %200 = arith.mulf %199, %197 : vector<8x32xf32>
    %201 = arith.mulf %190, %178 : vector<8x32xf32>
    %202 = arith.addf %200, %201 : vector<8x32xf32>
    %203 = tpu.concatenate %34, %58, %82, %106, %130, %154, %178, %202 in 0 : vector<8x32xf32>, vector<8x32xf32>, vector<8x32xf32>, vector<8x32xf32>, vector<8x32xf32>, vector<8x32xf32>, vector<8x32xf32>, vector<8x32xf32> -> vector<64x32xf32>
    %c0_32 = arith.constant 0 : index
    %c0_33 = arith.constant 0 : index
    %204 = vector.load %arg4[%c0_32, %c0_33] : memref<32x8xf32, #tpu.memory_space<vmem>>, vector<32x8xf32>
    %cst_34 = arith.constant dense<0.000000e+00> : vector<64x8xf32>
    %205 = tpu.matmul %203, %204, %cst_34 {dimension_numbers = #tpu.dot_dimension_numbers<[1], [0], [0], [1], [0, 0, 1, 1], [], []>} : vector<64x32xf32>, vector<32x8xf32>, vector<64x8xf32> -> vector<64x8xf32>
    %c0_35 = arith.constant 0 : index
    %c0_36 = arith.constant 0 : index
    %206 = vector.load %arg5[%c0_35, %c0_36] : memref<1x8xf32, #tpu.memory_space<vmem>>, vector<1x8xf32>
    %207 = vector.broadcast %206 : vector<1x8xf32> to vector<64x8xf32>
    %208 = arith.addf %205, %207 : vector<64x8xf32>
    %cst_37 = arith.constant dense<0xFF800000> : vector<64xf32>
    %209 = vector.multi_reduction <maximumf>, %208, %cst_37 [1] : vector<64x8xf32> to vector<64xf32>
    %210 = vector.shape_cast %209 : vector<64xf32> to vector<64x1xf32>
    %211 = vector.broadcast %210 : vector<64x1xf32> to vector<64x8xf32>
    %212 = arith.subf %208, %211 : vector<64x8xf32>
    %213 = math.exp %212 : vector<64x8xf32>
    %cst_38 = arith.constant dense<0.000000e+00> : vector<64xf32>
    %214 = vector.multi_reduction <add>, %213, %cst_38 [1] : vector<64x8xf32> to vector<64xf32>
    %215 = vector.shape_cast %214 : vector<64xf32> to vector<64x1xf32>
    %216 = math.log %215 : vector<64x1xf32>
    %217 = arith.addf %210, %216 : vector<64x1xf32>
    %218 = vector.broadcast %217 : vector<64x1xf32> to vector<64x8xf32>
    %219 = arith.subf %208, %218 : vector<64x8xf32>
    %c0_39 = arith.constant 0 : index
    %c0_40 = arith.constant 0 : index
    %220 = vector.load %arg6[%c0_39, %c0_40] : memref<64x8xf32, #tpu.memory_space<vmem>>, vector<64x8xf32>
    tpu.vector_store %arg6[%c0_39, %c0_40], %219 {strides = array<i32>} : memref<64x8xf32, #tpu.memory_space<vmem>>, vector<64x8xf32>,
    return
  }
}

</mosaic_0001>

<llo_original>
// kernel: tpu_custom_call.1
$region0: #{tpu_custom_call.1}
  #allocation0 [shape = 'u32[]', space=smem, size = 0x4, offset = 0x4, fixed_abs, tag = 'smem constant byte address 0x4 - core index']
  #allocation1 [shape = 'u32[144,128]{1,0:T(1,128)}', space=vmem, size = 0x12000, scoped, tag = 'internal scratch']
  %s0 = inlined_call_operand.vmem [shape: s32[64,1], index: 0, kind: input, shape index: {}]
  %s1 = inlined_call_operand.vmem [shape: f32[16,96], index: 1, kind: input, shape index: {}]
  %s2 = inlined_call_operand.vmem [shape: f32[32,96], index: 2, kind: input, shape index: {}]
  %s3 = inlined_call_operand.vmem [shape: f32[1,32], index: 3, kind: input, shape index: {}]
  %s4 = inlined_call_operand.vmem [shape: f32[32,8], index: 4, kind: input, shape index: {}]
  %s5 = inlined_call_operand.vmem [shape: f32[1,8], index: 5, kind: input, shape index: {}]
  %s6 = inlined_call_operand.vmem [shape: f32[64,8], index: 6, kind: output, shape index: {}]
  %s7 = sld [smem:[#allocation0]]
  $region34: #{tpu_custom_call.1} parent=0
    _
  %s9 = ssub.s32 1, %s7
  %s10 = scalar_select 0, %s9, %s7
  // Predicated region
  $region2: #{tpu_custom_call.1} parent=0 // pred_check
    _
  $region3: #{tpu_custom_call.1} parent=0 // pred_check_branch
    %12 = sbr.rel (0) target = $region5
  $region4: #{tpu_custom_call.1} parent=0 // pred_region
    _
  $region5: #{tpu_custom_call.1} parent=0 // pred_fallthru
    _
  // Predicated region
  $region6: #{tpu_custom_call.1} parent=0 // pred_check
    _
  $region7: #{tpu_custom_call.1} parent=0 // pred_check_branch
    %14 = sbr.rel (0) target = $region9
  $region8: #{tpu_custom_call.1} parent=0 // pred_region
    _
  $region9: #{tpu_custom_call.1} parent=0 // pred_fallthru
    _
  // Predicated region
  $region10: #{tpu_custom_call.1} parent=0 // pred_check
    _
  $region11: #{tpu_custom_call.1} parent=0 // pred_check_branch
    %16 = sbr.rel (0) target = $region13
  $region12: #{tpu_custom_call.1} parent=0 // pred_region
    _
  $region13: #{tpu_custom_call.1} parent=0 // pred_fallthru
    _
  // Predicated region
  $region14: #{tpu_custom_call.1} parent=0 // pred_check
    _
  $region15: #{tpu_custom_call.1} parent=0 // pred_check_branch
    %18 = sbr.rel (0) target = $region17
  $region16: #{tpu_custom_call.1} parent=0 // pred_region
    _
  $region17: #{tpu_custom_call.1} parent=0 // pred_fallthru
    _
  // Predicated region
  $region18: #{tpu_custom_call.1} parent=0 // pred_check
    _
  $region19: #{tpu_custom_call.1} parent=0 // pred_check_branch
    %20 = sbr.rel (0) target = $region21
  $region20: #{tpu_custom_call.1} parent=0 // pred_region
    _
  $region21: #{tpu_custom_call.1} parent=0 // pred_fallthru
    _
  // Predicated region
  $region22: #{tpu_custom_call.1} parent=0 // pred_check
    _
  $region23: #{tpu_custom_call.1} parent=0 // pred_check_branch
    %22 = sbr.rel (0) target = $region25
  $region24: #{tpu_custom_call.1} parent=0 // pred_region
    _
  $region25: #{tpu_custom_call.1} parent=0 // pred_fallthru
    _
  %v23 = vld [vmem:[%s0] sm:$0xff]
  %v24 = vld [vmem:[%s0 + $0x8] sm:$0xff]
  %v25 = vld [vmem:[%s0 + $0x10] sm:$0xff]
  %v26 = vld [vmem:[%s0 + $0x18] sm:$0xff]
  %v27 = vld [vmem:[%s0 + $0x20] sm:$0xff]
  %v28 = vld [vmem:[%s0 + $0x28] sm:$0xff]
  %v29 = vld [vmem:[%s0 + $0x30] sm:$0xff]
  %v30 = vld [vmem:[%s0 + $0x38] sm:$0xff]
  %v31 = vlaneseq
  %v32 = vand.u32 %v31, 127
  %33 = vset.pattern.permute.xlu0 0
  %34 = vperm.xlu0 %33, %v23
  %v35 = vpop.permute.xlu0 %34
  %36 = vset.pattern.permute.xlu0 0
  %37 = vperm.xlu0 %36, %v24
  %v38 = vpop.permute.xlu0 %37
  %39 = vset.pattern.permute.xlu0 0
  %40 = vperm.xlu0 %39, %v25
  %v41 = vpop.permute.xlu0 %40
  %42 = vset.pattern.permute.xlu0 0
  %43 = vperm.xlu0 %42, %v26
  %v44 = vpop.permute.xlu0 %43
  %45 = vset.pattern.permute.xlu0 0
  %46 = vperm.xlu0 %45, %v27
  %v47 = vpop.permute.xlu0 %46
  %48 = vset.pattern.permute.xlu0 0
  %49 = vperm.xlu0 %48, %v28
  %v50 = vpop.permute.xlu0 %49
  %51 = vset.pattern.permute.xlu0 0
  %52 = vperm.xlu0 %51, %v29
  %v53 = vpop.permute.xlu0 %52
  %54 = vset.pattern.permute.xlu0 0
  %55 = vperm.xlu0 %54, %v30
  %v56 = vpop.permute.xlu0 %55
  %vm57 = vcmp.eq.s32.totalorder %v32, %v35
  %vm58 = vcmp.eq.s32.totalorder %v32, %v38
  %vm59 = vcmp.eq.s32.totalorder %v32, %v41
  %vm60 = vcmp.eq.s32.totalorder %v32, %v44
  %vm61 = vcmp.eq.s32.totalorder %v32, %v47
  %vm62 = vcmp.eq.s32.totalorder %v32, %v50
  %vm63 = vcmp.eq.s32.totalorder %v32, %v53
  %vm64 = vcmp.eq.s32.totalorder %v32, %v56
  %v65 = vsel %vm57, 1, 0
  %v66 = vsel %vm58, 1, 0
  %v67 = vsel %vm59, 1, 0
  %v68 = vsel %vm60, 1, 0
  %v69 = vsel %vm61, 1, 0
  %v70 = vsel %vm62, 1, 0
  %v71 = vsel %vm63, 1, 0
  %v72 = vsel %vm64, 1, 0
  %v73 = vcvt.s32.f32 %v65
  %v74 = vcvt.s32.f32 %v66
  %v75 = vcvt.s32.f32 %v67
  %v76 = vcvt.s32.f32 %v68
  %v77 = vcvt.s32.f32 %v69
  %v78 = vcvt.s32.f32 %v70
  %v79 = vcvt.s32.f32 %v71
  %v80 = vcvt.s32.f32 %v72
  %v81 = vld [vmem:[%s1] sm:$0xff]
  %v82 = vld [vmem:[%s1 + $0x8] sm:$0xff]
  %vm83 = vcmask 130048
  %v85 = vsel %vm83, %v73, 0
  %v88 = vsel %vm83, %v74, 0
  %v91 = vsel %vm83, %v75, 0
  %v94 = vsel %vm83, %v76, 0
  %v97 = vsel %vm83, %v77, 0
  %v100 = vsel %vm83, %v78, 0
  %v103 = vsel %vm83, %v79, 0
  %v106 = vsel %vm83, %v80, 0
  %108 = vmatprep.subr.mxu0 0.0
  %109 = vmatpush1.msra.mxu0 %v81
  %110 = vmatprep.subr.mxu0 0.0
  %111 = vmatpush1.msra.mxu0 %v82
  %112 = vmatprep.subr.mxu0 0.0
  %113 = vmatpush1.msra.mxu0 0.0
  %114 = vmatprep.subr.mxu0 0.0
  %115 = vmatpush1.msra.mxu0 0.0
  %116 = vmatprep.subr.mxu0 0.0
  %117 = vmatpush1.msra.mxu0 0.0
  %118 = vmatprep.subr.mxu0 0.0
  %119 = vmatpush1.msra.mxu0 0.0
  %120 = vmatprep.subr.mxu0 0.0
  %121 = vmatpush1.msra.mxu0 0.0
  %122 = vmatprep.subr.mxu0 0.0
  %123 = vmatpush1.msra.mxu0 0.0
  %124 = vmatprep.subr.mxu0 0.0
  %125 = vmatpush1.msra.mxu0 0.0
  %126 = vmatprep.subr.mxu0 0.0
  %127 = vmatpush1.msra.mxu0 0.0
  %128 = vmatprep.subr.mxu0 0.0
  %129 = vmatpush1.msra.mxu0 0.0
  %130 = vmatprep.subr.mxu0 0.0
  %131 = vmatpush1.msra.mxu0 0.0
  %132 = vmatprep.subr.mxu0 0.0
  %133 = vmatpush1.msra.mxu0 0.0
  %134 = vmatprep.subr.mxu0 0.0
  %135 = vmatpush1.msra.mxu0 0.0
  %136 = vmatprep.subr.mxu0 0.0
  %137 = vmatpush1.msra.mxu0 0.0
  %138 = vmatprep.subr.mxu0 0.0
  %139 = vmatpush1.msra.mxu0 0.0
  %140 = vmatprep.subr.mxu0 0.0
  %141 = vmatpush1.msra.mxu0 0.0
  %142 = vmatprep.subr.mxu0 0.0
  %143 = vmatpush1.msra.mxu0 0.0
  %144 = vmatprep.subr.mxu0 0.0
  %145 = vmatpush1.msra.mxu0 0.0
  %146 = vmatprep.subr.mxu0 0.0
  %147 = vmatpush1.msra.mxu0 0.0
  %148 = vmatprep.subr.mxu0 0.0
  %149 = vmatpush1.msra.mxu0 0.0
  %150 = vmatprep.subr.mxu0 0.0
  %151 = vmatpush1.msra.mxu0 0.0
  %152 = vmatprep.subr.mxu0 0.0
  %153 = vmatpush1.msra.mxu0 0.0
  %154 = vmatprep.subr.mxu0 0.0
  %155 = vmatpush1.msra.mxu0 0.0
  %156 = vmatprep.subr.mxu0 0.0
  %157 = vmatpush1.msra.mxu0 0.0
  %158 = vmatprep.subr.mxu0 0.0
  %159 = vmatpush1.msra.mxu0 0.0
  %160 = vmatprep.subr.mxu0 0.0
  %161 = vmatpush1.msra.mxu0 0.0
  %162 = vmatprep.subr.mxu0 0.0
  %163 = vmatpush1.msra.mxu0 0.0
  %164 = vmatprep.subr.mxu0 0.0
  %165 = vmatpush1.msra.mxu0 0.0
  %166 = vmatprep.subr.mxu0 0.0
  %167 = vmatpush1.msra.mxu0 0.0
  %168 = vmatprep.subr.mxu0 0.0
  %169 = vmatpush1.msra.mxu0 0.0
  %170 = vmatprep.subr.mxu0 0.0
  %171 = vmatpush1.msra.mxu0 0.0
  %172 = vmatprep.mubr.f32.mxu0 0.0
  %173 = vmatmul.mubr.f32.gmra.mrb[0].mxu0 %v85
  %v174 = vpop.f32.mrb[0].mxu0
  %v175 = vadd.f32 0.0, %v174
  %v176 = vpop.f32.mrb[0].mxu0
  %177 = vmatprep.mubr.f32.mxu0 0.0
  %178 = vmatmul.mubr.f32.gmra.mrb[0].mxu0 %v88
  %v179 = vpop.f32.mrb[0].mxu0
  %v180 = vadd.f32 0.0, %v179
  %v181 = vpop.f32.mrb[0].mxu0
  %182 = vmatprep.mubr.f32.mxu0 0.0
  %183 = vmatmul.mubr.f32.gmra.mrb[0].mxu0 %v91
  %v184 = vpop.f32.mrb[0].mxu0
  %v185 = vadd.f32 0.0, %v184
  %v186 = vpop.f32.mrb[0].mxu0
  %187 = vmatprep.mubr.f32.mxu0 0.0
  %188 = vmatmul.mubr.f32.gmra.mrb[0].mxu0 %v94
  %v189 = vpop.f32.mrb[0].mxu0
  %v190 = vadd.f32 0.0, %v189
  %v191 = vpop.f32.mrb[0].mxu0
  %192 = vmatprep.mubr.f32.mxu0 0.0
  %193 = vmatmul.mubr.f32.gmra.mrb[0].mxu0 %v97
  %v194 = vpop.f32.mrb[0].mxu0
  %v195 = vadd.f32 0.0, %v194
  %v196 = vpop.f32.mrb[0].mxu0
  %197 = vmatprep.mubr.f32.mxu0 0.0
  %198 = vmatmul.mubr.f32.gmra.mrb[0].mxu0 %v100
  %v199 = vpop.f32.mrb[0].mxu0
  %v200 = vadd.f32 0.0, %v199
  %v201 = vpop.f32.mrb[0].mxu0
  %202 = vmatprep.mubr.f32.mxu0 0.0
  %203 = vmatmul.mubr.f32.gmra.mrb[0].mxu0 %v103
  %v204 = vpop.f32.mrb[0].mxu0
  %v205 = vadd.f32 0.0, %v204
  %v206 = vpop.f32.mrb[0].mxu0
  %207 = vmatprep.mubr.f32.mxu0 0.0
  %208 = vmatmul.mubr.f32.gmra.mrb[0].mxu0 %v106
  %v209 = vpop.f32.mrb[0].mxu0
  %v210 = vadd.f32 0.0, %v209
  %v211 = vpop.f32.mrb[0].mxu0
  %212 = vdwg.mxu0
  %v213 = vld [vmem:[%s2] sm:$0xff]
  %v214 = vld [vmem:[%s2 + $0x8] sm:$0xff]
  %v215 = vld [vmem:[%s2 + $0x10] sm:$0xff]
  %v216 = vld [vmem:[%s2 + $0x18] sm:$0xff]
  %v217 = vld [vmem:[%s3] sm:$0x1]
  %vm218 = vcmask 261120
  %v220 = vsel %vm218, 0.0, 0
  %222 = vmatprep.subr.mxu0 0.0
  %223 = vmatpush1.msra.mxu0 %v213
  %224 = vmatprep.subr.mxu0 0.0
  %225 = vmatpush1.msra.mxu0 %v214
  %226 = vmatprep.subr.mxu0 0.0
  %227 = vmatpush1.msra.mxu0 %v215
  %228 = vmatprep.subr.mxu0 0.0
  %229 = vmatpush1.msra.mxu0 %v216
  %230 = vmatprep.subr.mxu0 0.0
  %231 = vmatpush1.msra.mxu0 0.0
  %232 = vmatprep.subr.mxu0 0.0
  %233 = vmatpush1.msra.mxu0 0.0
  %234 = vmatprep.subr.mxu0 0.0
  %235 = vmatpush1.msra.mxu0 0.0
  %236 = vmatprep.subr.mxu0 0.0
  %237 = vmatpush1.msra.mxu0 0.0
  %238 = vmatprep.subr.mxu0 0.0
  %239 = vmatpush1.msra.mxu0 0.0
  %240 = vmatprep.subr.mxu0 0.0
  %241 = vmatpush1.msra.mxu0 0.0
  %242 = vmatprep.subr.mxu0 0.0
  %243 = vmatpush1.msra.mxu0 0.0
  %244 = vmatprep.subr.mxu0 0.0
  %245 = vmatpush1.msra.mxu0 0.0
  %246 = vmatprep.subr.mxu0 0.0
  %247 = vmatpush1.msra.mxu0 0.0
  %248 = vmatprep.subr.mxu0 0.0
  %249 = vmatpush1.msra.mxu0 0.0
  %250 = vmatprep.subr.mxu0 0.0
  %251 = vmatpush1.msra.mxu0 0.0
  %252 = vmatprep.subr.mxu0 0.0
  %253 = vmatpush1.msra.mxu0 0.0
  %254 = vmatprep.subr.mxu0 0.0
  %255 = vmatpush1.msra.mxu0 0.0
  %256 = vmatprep.subr.mxu0 0.0
  %257 = vmatpush1.msra.mxu0 0.0
  %258 = vmatprep.subr.mxu0 0.0
  %259 = vmatpush1.msra.mxu0 0.0
  %260 = vmatprep.subr.mxu0 0.0
  %261 = vmatpush1.msra.mxu0 0.0
  %262 = vmatprep.subr.mxu0 0.0
  %263 = vmatpush1.msra.mxu0 0.0
  %264 = vmatprep.subr.mxu0 0.0
  %265 = vmatpush1.msra.mxu0 0.0
  %266 = vmatprep.subr.mxu0 0.0
  %267 = vmatpush1.msra.mxu0 0.0
  %268 = vmatprep.subr.mxu0 0.0
  %269 = vmatpush1.msra.mxu0 0.0
  %270 = vmatprep.subr.mxu0 0.0
  %271 = vmatpush1.msra.mxu0 0.0
  %272 = vmatprep.subr.mxu0 0.0
  %273 = vmatpush1.msra.mxu0 0.0
  %274 = vmatprep.subr.mxu0 0.0
  %275 = vmatpush1.msra.mxu0 0.0
  %276 = vmatprep.subr.mxu0 0.0
  %277 = vmatpush1.msra.mxu0 0.0
  %278 = vmatprep.subr.mxu0 0.0
  %279 = vmatpush1.msra.mxu0 0.0
  %280 = vmatprep.subr.mxu0 0.0
  %281 = vmatpush1.msra.mxu0 0.0
  %282 = vmatprep.subr.mxu0 0.0
  %283 = vmatpush1.msra.mxu0 0.0
  %284 = vmatprep.subr.mxu0 0.0
  %285 = vmatpush1.msra.mxu0 0.0
  %286 = vmatprep.mubr.f32.mxu0 0.0
  %287 = vmatmul.mubr.f32.gmra.mrb[0].mxu0 %v220
  %v288 = vpop.f32.mrb[0].mxu0
  %v289 = vadd.f32 0.0, %v288
  %v290 = vpop.f32.mrb[0].mxu0
  %291 = vdwg.mxu0
  %v292 = vadd.f32 %v175, %v289
  %v293 = vxor.u32 %v292, 2147483648
  %v294 = vmul.f32 %v293, 1.442695
  %v295 = vpow.pop %v294
  %v296 = vadd.f32 %v295, 1.0
  %v297 = vrcp.pop %v296
  %v298 = vmul.f32 1.0, %v297
  %v300 = vlaneseq
  %v301 = vshrl.u32 %v300, 7
  %v302 = vsub.s32 0, %v301
  %v303 = vrot.slane %v217, %v302
  %304 = vrot.lane.b32.xlu0 %v303, 64
  %v305 = vpop.permute.xlu0 %304
  %v307 = vadd.f32 %v289, %v305
  %309 = vrot.lane.b32.xlu0 %v307, 64
  %v310 = vpop.permute.xlu0 %309
  %v312 = vmul.f32 %v298, %v310
  %314 = vrot.lane.b32.xlu0 %v312, 64
  %v315 = vpop.permute.xlu0 %314
  %v317 = vadd.f32 %v175, %v315
  %v318 = vtanh.pop %v317
  %v319 = vsub.f32 1.0, %v298
  %321 = vrot.lane.b32.xlu0 %v318, 96
  %v322 = vpop.permute.xlu0 %321
  %v324 = vmul.f32 %v319, %v322
  %v325 = vmul.f32 %v298, 0.0
  %v326 = vadd.f32 %v324, %v325
  %328 = vrot.lane.b32.xlu0 %v326, 96
  %v329 = vpop.permute.xlu0 %328
  %v330 = vsel %vm218, %v329, 0
  %332 = vmatprep.subr.mxu0 0.0
  %333 = vmatpush1.msra.mxu0 %v213
  %334 = vmatprep.subr.mxu0 0.0
  %335 = vmatpush1.msra.mxu0 %v214
  %336 = vmatprep.subr.mxu0 0.0
  %337 = vmatpush1.msra.mxu0 %v215
  %338 = vmatprep.subr.mxu0 0.0
  %339 = vmatpush1.msra.mxu0 %v216
  %340 = vmatprep.subr.mxu0 0.0
  %341 = vmatpush1.msra.mxu0 0.0
  %342 = vmatprep.subr.mxu0 0.0
  %343 = vmatpush1.msra.mxu0 0.0
  %344 = vmatprep.subr.mxu0 0.0
  %345 = vmatpush1.msra.mxu0 0.0
  %346 = vmatprep.subr.mxu0 0.0
  %347 = vmatpush1.msra.mxu0 0.0
  %348 = vmatprep.subr.mxu0 0.0
  %349 = vmatpush1.msra.mxu0 0.0
  %350 = vmatprep.subr.mxu0 0.0
  %351 = vmatpush1.msra.mxu0 0.0
  %352 = vmatprep.subr.mxu0 0.0
  %353 = vmatpush1.msra.mxu0 0.0
  %354 = vmatprep.subr.mxu0 0.0
  %355 = vmatpush1.msra.mxu0 0.0
  %356 = vmatprep.subr.mxu0 0.0
  %357 = vmatpush1.msra.mxu0 0.0
  %358 = vmatprep.subr.mxu0 0.0
  %359 = vmatpush1.msra.mxu0 0.0
  %360 = vmatprep.subr.mxu0 0.0
  %361 = vmatpush1.msra.mxu0 0.0
  %362 = vmatprep.subr.mxu0 0.0
  %363 = vmatpush1.msra.mxu0 0.0
  %364 = vmatprep.subr.mxu0 0.0
  %365 = vmatpush1.msra.mxu0 0.0
  %366 = vmatprep.subr.mxu0 0.0
  %367 = vmatpush1.msra.mxu0 0.0
  %368 = vmatprep.subr.mxu0 0.0
  %369 = vmatpush1.msra.mxu0 0.0
  %370 = vmatprep.subr.mxu0 0.0
  %371 = vmatpush1.msra.mxu0 0.0
  %372 = vmatprep.subr.mxu0 0.0
  %373 = vmatpush1.msra.mxu0 0.0
  %374 = vmatprep.subr.mxu0 0.0
  %375 = vmatpush1.msra.mxu0 0.0
  %376 = vmatprep.subr.mxu0 0.0
  %377 = vmatpush1.msra.mxu0 0.0
  %378 = vmatprep.subr.mxu0 0.0
  %379 = vmatpush1.msra.mxu0 0.0
  %380 = vmatprep.subr.mxu0 0.0
  %381 = vmatpush1.msra.mxu0 0.0
  %382 = vmatprep.subr.mxu0 0.0
  %383 = vmatpush1.msra.mxu0 0.0
  %384 = vmatprep.subr.mxu0 0.0
  %385 = vmatpush1.msra.mxu0 0.0
  %386 = vmatprep.subr.mxu0 0.0
  %387 = vmatpush1.msra.mxu0 0.0
  %388 = vmatprep.subr.mxu0 0.0
  %389 = vmatpush1.msra.mxu0 0.0
  %390 = vmatprep.subr.mxu0 0.0
  %391 = vmatpush1.msra.mxu0 0.0
  %392 = vmatprep.subr.mxu0 0.0
  %393 = vmatpush1.msra.mxu0 0.0
  %394 = vmatprep.subr.mxu0 0.0
  %395 = vmatpush1.msra.mxu0 0.0
  %396 = vmatprep.mubr.f32.mxu0 0.0
  %397 = vmatmul.mubr.f32.gmra.mrb[0].mxu0 %v330
  %v398 = vpop.f32.mrb[0].mxu0
  %v399 = vadd.f32 0.0, %v398
  %v400 = vpop.f32.mrb[0].mxu0
  %401 = vdwg.mxu0
  %v402 = vadd.f32 %v180, %v399
  %v403 = vxor.u32 %v402, 2147483648
  %v404 = vmul.f32 %v403, 1.442695
  %v405 = vpow.pop %v404
  %v406 = vadd.f32 %v405, 1.0
  %v407 = vrcp.pop %v406
  %v408 = vmul.f32 1.0, %v407
  %v409 = vadd.f32 %v399, %v305
  %411 = vrot.lane.b32.xlu0 %v409, 64
  %v412 = vpop.permute.xlu0 %411
  %v414 = vmul.f32 %v408, %v412
  %416 = vrot.lane.b32.xlu0 %v414, 64
  %v417 = vpop.permute.xlu0 %416
  %v419 = vadd.f32 %v180, %v417
  %v420 = vtanh.pop %v419
  %v421 = vsub.f32 1.0, %v408
  %423 = vrot.lane.b32.xlu0 %v420, 96
  %v424 = vpop.permute.xlu0 %423
  %v426 = vmul.f32 %v421, %v424
  %v427 = vmul.f32 %v408, %v326
  %v428 = vadd.f32 %v426, %v427
  %430 = vrot.lane.b32.xlu0 %v428, 96
  %v431 = vpop.permute.xlu0 %430
  %v432 = vsel %vm218, %v431, 0
  %434 = vmatprep.subr.mxu0 0.0
  %435 = vmatpush1.msra.mxu0 %v213
  %436 = vmatprep.subr.mxu0 0.0
  %437 = vmatpush1.msra.mxu0 %v214
  %438 = vmatprep.subr.mxu0 0.0
  %439 = vmatpush1.msra.mxu0 %v215
  %440 = vmatprep.subr.mxu0 0.0
  %441 = vmatpush1.msra.mxu0 %v216
  %442 = vmatprep.subr.mxu0 0.0
  %443 = vmatpush1.msra.mxu0 0.0
  %444 = vmatprep.subr.mxu0 0.0
  %445 = vmatpush1.msra.mxu0 0.0
  %446 = vmatprep.subr.mxu0 0.0
  %447 = vmatpush1.msra.mxu0 0.0
  %448 = vmatprep.subr.mxu0 0.0
  %449 = vmatpush1.msra.mxu0 0.0
  %450 = vmatprep.subr.mxu0 0.0
  %451 = vmatpush1.msra.mxu0 0.0
  %452 = vmatprep.subr.mxu0 0.0
  %453 = vmatpush1.msra.mxu0 0.0
  %454 = vmatprep.subr.mxu0 0.0
  %455 = vmatpush1.msra.mxu0 0.0
  %456 = vmatprep.subr.mxu0 0.0
  %457 = vmatpush1.msra.mxu0 0.0
  %458 = vmatprep.subr.mxu0 0.0
  %459 = vmatpush1.msra.mxu0 0.0
  %460 = vmatprep.subr.mxu0 0.0
  %461 = vmatpush1.msra.mxu0 0.0
  %462 = vmatprep.subr.mxu0 0.0
  %463 = vmatpush1.msra.mxu0 0.0
  %464 = vmatprep.subr.mxu0 0.0
  %465 = vmatpush1.msra.mxu0 0.0
  %466 = vmatprep.subr.mxu0 0.0
  %467 = vmatpush1.msra.mxu0 0.0
  %468 = vmatprep.subr.mxu0 0.0
  %469 = vmatpush1.msra.mxu0 0.0
  %470 = vmatprep.subr.mxu0 0.0
  %471 = vmatpush1.msra.mxu0 0.0
  %472 = vmatprep.subr.mxu0 0.0
  %473 = vmatpush1.msra.mxu0 0.0
  %474 = vmatprep.subr.mxu0 0.0
  %475 = vmatpush1.msra.mxu0 0.0
  %476 = vmatprep.subr.mxu0 0.0
  %477 = vmatpush1.msra.mxu0 0.0
  %478 = vmatprep.subr.mxu0 0.0
  %479 = vmatpush1.msra.mxu0 0.0
  %480 = vmatprep.subr.mxu0 0.0
  %481 = vmatpush1.msra.mxu0 0.0
  %482 = vmatprep.subr.mxu0 0.0
  %483 = vmatpush1.msra.mxu0 0.0
  %484 = vmatprep.subr.mxu0 0.0
  %485 = vmatpush1.msra.mxu0 0.0
  %486 = vmatprep.subr.mxu0 0.0
  %487 = vmatpush1.msra.mxu0 0.0
  %488 = vmatprep.subr.mxu0 0.0
  %489 = vmatpush1.msra.mxu0 0.0
  %490 = vmatprep.subr.mxu0 0.0
  %491 = vmatpush1.msra.mxu0 0.0
  %492 = vmatprep.subr.mxu0 0.0
  %493 = vmatpush1.msra.mxu0 0.0
  %494 = vmatprep.subr.mxu0 0.0
  %495 = vmatpush1.msra.mxu0 0.0
  %496 = vmatprep.subr.mxu0 0.0
  %497 = vmatpush1.msra.mxu0 0.0
  %498 = vmatprep.mubr.f32.mxu0 0.0
  %499 = vmatmul.mubr.f32.gmra.mrb[0].mxu0 %v432
  %v500 = vpop.f32.mrb[0].mxu0
  %v501 = vadd.f32 0.0, %v500
  %v502 = vpop.f32.mrb[0].mxu0
  %503 = vdwg.mxu0
  %v504 = vadd.f32 %v185, %v501
  %v505 = vxor.u32 %v504, 2147483648
  %v506 = vmul.f32 %v505, 1.442695
  %v507 = vpow.pop %v506
  %v508 = vadd.f32 %v507, 1.0
  %v509 = vrcp.pop %v508
  %v510 = vmul.f32 1.0, %v509
  %v511 = vadd.f32 %v501, %v305
  %513 = vrot.lane.b32.xlu0 %v511, 64
  %v514 = vpop.permute.xlu0 %513
  %v516 = vmul.f32 %v510, %v514
  %518 = vrot.lane.b32.xlu0 %v516, 64
  %v519 = vpop.permute.xlu0 %518
  %v521 = vadd.f32 %v185, %v519
  %v522 = vtanh.pop %v521
  %v523 = vsub.f32 1.0, %v510
  %525 = vrot.lane.b32.xlu0 %v522, 96
  %v526 = vpop.permute.xlu0 %525
  %v528 = vmul.f32 %v523, %v526
  %v529 = vmul.f32 %v510, %v428
  %v530 = vadd.f32 %v528, %v529
  %532 = vrot.lane.b32.xlu0 %v530, 96
  %v533 = vpop.permute.xlu0 %532
  %v534 = vsel %vm218, %v533, 0
  %536 = vmatprep.subr.mxu0 0.0
  %537 = vmatpush1.msra.mxu0 %v213
  %538 = vmatprep.subr.mxu0 0.0
  %539 = vmatpush1.msra.mxu0 %v214
  %540 = vmatprep.subr.mxu0 0.0
  %541 = vmatpush1.msra.mxu0 %v215
  %542 = vmatprep.subr.mxu0 0.0
  %543 = vmatpush1.msra.mxu0 %v216
  %544 = vmatprep.subr.mxu0 0.0
  %545 = vmatpush1.msra.mxu0 0.0
  %546 = vmatprep.subr.mxu0 0.0
  %547 = vmatpush1.msra.mxu0 0.0
  %548 = vmatprep.subr.mxu0 0.0
  %549 = vmatpush1.msra.mxu0 0.0
  %550 = vmatprep.subr.mxu0 0.0
  %551 = vmatpush1.msra.mxu0 0.0
  %552 = vmatprep.subr.mxu0 0.0
  %553 = vmatpush1.msra.mxu0 0.0
  %554 = vmatprep.subr.mxu0 0.0
  %555 = vmatpush1.msra.mxu0 0.0
  %556 = vmatprep.subr.mxu0 0.0
  %557 = vmatpush1.msra.mxu0 0.0
  %558 = vmatprep.subr.mxu0 0.0
  %559 = vmatpush1.msra.mxu0 0.0
  %560 = vmatprep.subr.mxu0 0.0
  %561 = vmatpush1.msra.mxu0 0.0
  %562 = vmatprep.subr.mxu0 0.0
  %563 = vmatpush1.msra.mxu0 0.0
  %564 = vmatprep.subr.mxu0 0.0
  %565 = vmatpush1.msra.mxu0 0.0
  %566 = vmatprep.subr.mxu0 0.0
  %567 = vmatpush1.msra.mxu0 0.0
  %568 = vmatprep.subr.mxu0 0.0
  %569 = vmatpush1.msra.mxu0 0.0
  %570 = vmatprep.subr.mxu0 0.0
  %571 = vmatpush1.msra.mxu0 0.0
  %572 = vmatprep.subr.mxu0 0.0
  %573 = vmatpush1.msra.mxu0 0.0
  %574 = vmatprep.subr.mxu0 0.0
  %575 = vmatpush1.msra.mxu0 0.0
  %576 = vmatprep.subr.mxu0 0.0
  %577 = vmatpush1.msra.mxu0 0.0
  %578 = vmatprep.subr.mxu0 0.0
  %579 = vmatpush1.msra.mxu0 0.0
  %580 = vmatprep.subr.mxu0 0.0
  %581 = vmatpush1.msra.mxu0 0.0
  %582 = vmatprep.subr.mxu0 0.0
  %583 = vmatpush1.msra.mxu0 0.0
  %584 = vmatprep.subr.mxu0 0.0
  %585 = vmatpush1.msra.mxu0 0.0
  %586 = vmatprep.subr.mxu0 0.0
  %587 = vmatpush1.msra.mxu0 0.0
  %588 = vmatprep.subr.mxu0 0.0
  %589 = vmatpush1.msra.mxu0 0.0
  %590 = vmatprep.subr.mxu0 0.0
  %591 = vmatpush1.msra.mxu0 0.0
  %592 = vmatprep.subr.mxu0 0.0
  %593 = vmatpush1.msra.mxu0 0.0
  %594 = vmatprep.subr.mxu0 0.0
  %595 = vmatpush1.msra.mxu0 0.0
  %596 = vmatprep.subr.mxu0 0.0
  %597 = vmatpush1.msra.mxu0 0.0
  %598 = vmatprep.subr.mxu0 0.0
  %599 = vmatpush1.msra.mxu0 0.0
  %600 = vmatprep.mubr.f32.mxu0 0.0
  %601 = vmatmul.mubr.f32.gmra.mrb[0].mxu0 %v534
  %v602 = vpop.f32.mrb[0].mxu0
  %v603 = vadd.f32 0.0, %v602
  %v604 = vpop.f32.mrb[0].mxu0
  %605 = vdwg.mxu0
  %v606 = vadd.f32 %v190, %v603
  %v607 = vxor.u32 %v606, 2147483648
  %v608 = vmul.f32 %v607, 1.442695
  %v609 = vpow.pop %v608
  %v610 = vadd.f32 %v609, 1.0
  %v611 = vrcp.pop %v610
  %v612 = vmul.f32 1.0, %v611
  %v613 = vadd.f32 %v603, %v305
  %615 = vrot.lane.b32.xlu0 %v613, 64
  %v616 = vpop.permute.xlu0 %615
  %v618 = vmul.f32 %v612, %v616
  %620 = vrot.lane.b32.xlu0 %v618, 64
  %v621 = vpop.permute.xlu0 %620
  %v623 = vadd.f32 %v190, %v621
  %v624 = vtanh.pop %v623
  %v625 = vsub.f32 1.0, %v612
  %627 = vrot.lane.b32.xlu0 %v624, 96
  %v628 = vpop.permute.xlu0 %627
  %v630 = vmul.f32 %v625, %v628
  %v631 = vmul.f32 %v612, %v530
  %v632 = vadd.f32 %v630, %v631
  %634 = vrot.lane.b32.xlu0 %v632, 96
  %v635 = vpop.permute.xlu0 %634
  %v636 = vsel %vm218, %v635, 0
  %638 = vmatprep.subr.mxu0 0.0
  %639 = vmatpush1.msra.mxu0 %v213
  %640 = vmatprep.subr.mxu0 0.0
  %641 = vmatpush1.msra.mxu0 %v214
  %642 = vmatprep.subr.mxu0 0.0
  %643 = vmatpush1.msra.mxu0 %v215
  %644 = vmatprep.subr.mxu0 0.0
  %645 = vmatpush1.msra.mxu0 %v216
  %646 = vmatprep.subr.mxu0 0.0
  %647 = vmatpush1.msra.mxu0 0.0
  %648 = vmatprep.subr.mxu0 0.0
  %649 = vmatpush1.msra.mxu0 0.0
  %650 = vmatprep.subr.mxu0 0.0
  %651 = vmatpush1.msra.mxu0 0.0
  %652 = vmatprep.subr.mxu0 0.0
  %653 = vmatpush1.msra.mxu0 0.0
  %654 = vmatprep.subr.mxu0 0.0
  %655 = vmatpush1.msra.mxu0 0.0
  %656 = vmatprep.subr.mxu0 0.0
  %657 = vmatpush1.msra.mxu0 0.0
  %658 = vmatprep.subr.mxu0 0.0
  %659 = vmatpush1.msra.mxu0 0.0
  %660 = vmatprep.subr.mxu0 0.0
  %661 = vmatpush1.msra.mxu0 0.0
  %662 = vmatprep.subr.mxu0 0.0
  %663 = vmatpush1.msra.mxu0 0.0
  %664 = vmatprep.subr.mxu0 0.0
  %665 = vmatpush1.msra.mxu0 0.0
  %666 = vmatprep.subr.mxu0 0.0
  %667 = vmatpush1.msra.mxu0 0.0
  %668 = vmatprep.subr.mxu0 0.0
  %669 = vmatpush1.msra.mxu0 0.0
  %670 = vmatprep.subr.mxu0 0.0
  %671 = vmatpush1.msra.mxu0 0.0
  %672 = vmatprep.subr.mxu0 0.0
  %673 = vmatpush1.msra.mxu0 0.0
  %674 = vmatprep.subr.mxu0 0.0
  %675 = vmatpush1.msra.mxu0 0.0
  %676 = vmatprep.subr.mxu0 0.0
  %677 = vmatpush1.msra.mxu0 0.0
  %678 = vmatprep.subr.mxu0 0.0
  %679 = vmatpush1.msra.mxu0 0.0
  %680 = vmatprep.subr.mxu0 0.0
  %681 = vmatpush1.msra.mxu0 0.0
  %682 = vmatprep.subr.mxu0 0.0
  %683 = vmatpush1.msra.mxu0 0.0
  %684 = vmatprep.subr.mxu0 0.0
  %685 = vmatpush1.msra.mxu0 0.0
  %686 = vmatprep.subr.mxu0 0.0
  %687 = vmatpush1.msra.mxu0 0.0
  %688 = vmatprep.subr.mxu0 0.0
  %689 = vmatpush1.msra.mxu0 0.0
  %690 = vmatprep.subr.mxu0 0.0
  %691 = vmatpush1.msra.mxu0 0.0
  %692 = vmatprep.subr.mxu0 0.0
  %693 = vmatpush1.msra.mxu0 0.0
  %694 = vmatprep.subr.mxu0 0.0
  %695 = vmatpush1.msra.mxu0 0.0
  %696 = vmatprep.subr.mxu0 0.0
  %697 = vmatpush1.msra.mxu0 0.0
  %698 = vmatprep.subr.mxu0 0.0
  %699 = vmatpush1.msra.mxu0 0.0
  %700 = vmatprep.subr.mxu0 0.0
  %701 = vmatpush1.msra.mxu0 0.0
  %702 = vmatprep.mubr.f32.mxu0 0.0
  %703 = vmatmul.mubr.f32.gmra.mrb[0].mxu0 %v636
  %v704 = vpop.f32.mrb[0].mxu0
  %v705 = vadd.f32 0.0, %v704
  %v706 = vpop.f32.mrb[0].mxu0
  %707 = vdwg.mxu0
  %v708 = vadd.f32 %v195, %v705
  %v709 = vxor.u32 %v708, 2147483648
  %v710 = vmul.f32 %v709, 1.442695
  %v711 = vpow.pop %v710
  %v712 = vadd.f32 %v711, 1.0
  %v713 = vrcp.pop %v712
  %v714 = vmul.f32 1.0, %v713
  %v715 = vadd.f32 %v705, %v305
  %717 = vrot.lane.b32.xlu0 %v715, 64
  %v718 = vpop.permute.xlu0 %717
  %v720 = vmul.f32 %v714, %v718
  %722 = vrot.lane.b32.xlu0 %v720, 64
  %v723 = vpop.permute.xlu0 %722
  %v725 = vadd.f32 %v195, %v723
  %v726 = vtanh.pop %v725
  %v727 = vsub.f32 1.0, %v714
  %729 = vrot.lane.b32.xlu0 %v726, 96
  %v730 = vpop.permute.xlu0 %729
  %v732 = vmul.f32 %v727, %v730
  %v733 = vmul.f32 %v714, %v632
  %v734 = vadd.f32 %v732, %v733
  %736 = vrot.lane.b32.xlu0 %v734, 96
  %v737 = vpop.permute.xlu0 %736
  %v738 = vsel %vm218, %v737, 0
  %740 = vmatprep.subr.mxu0 0.0
  %741 = vmatpush1.msra.mxu0 %v213
  %742 = vmatprep.subr.mxu0 0.0
  %743 = vmatpush1.msra.mxu0 %v214
  %744 = vmatprep.subr.mxu0 0.0
  %745 = vmatpush1.msra.mxu0 %v215
  %746 = vmatprep.subr.mxu0 0.0
  %747 = vmatpush1.msra.mxu0 %v216
  %748 = vmatprep.subr.mxu0 0.0
  %749 = vmatpush1.msra.mxu0 0.0
  %750 = vmatprep.subr.mxu0 0.0
  %751 = vmatpush1.msra.mxu0 0.0
  %752 = vmatprep.subr.mxu0 0.0
  %753 = vmatpush1.msra.mxu0 0.0
  %754 = vmatprep.subr.mxu0 0.0
  %755 = vmatpush1.msra.mxu0 0.0
  %756 = vmatprep.subr.mxu0 0.0
  %757 = vmatpush1.msra.mxu0 0.0
  %758 = vmatprep.subr.mxu0 0.0
  %759 = vmatpush1.msra.mxu0 0.0
  %760 = vmatprep.subr.mxu0 0.0
  %761 = vmatpush1.msra.mxu0 0.0
  %762 = vmatprep.subr.mxu0 0.0
  %763 = vmatpush1.msra.mxu0 0.0
  %764 = vmatprep.subr.mxu0 0.0
  %765 = vmatpush1.msra.mxu0 0.0
  %766 = vmatprep.subr.mxu0 0.0
  %767 = vmatpush1.msra.mxu0 0.0
  %768 = vmatprep.subr.mxu0 0.0
  %769 = vmatpush1.msra.mxu0 0.0
  %770 = vmatprep.subr.mxu0 0.0
  %771 = vmatpush1.msra.mxu0 0.0
  %772 = vmatprep.subr.mxu0 0.0
  %773 = vmatpush1.msra.mxu0 0.0
  %774 = vmatprep.subr.mxu0 0.0
  %775 = vmatpush1.msra.mxu0 0.0
  %776 = vmatprep.subr.mxu0 0.0
  %777 = vmatpush1.msra.mxu0 0.0
  %778 = vmatprep.subr.mxu0 0.0
  %779 = vmatpush1.msra.mxu0 0.0
  %780 = vmatprep.subr.mxu0 0.0
  %781 = vmatpush1.msra.mxu0 0.0
  %782 = vmatprep.subr.mxu0 0.0
  %783 = vmatpush1.msra.mxu0 0.0
  %784 = vmatprep.subr.mxu0 0.0
  %785 = vmatpush1.msra.mxu0 0.0
  %786 = vmatprep.subr.mxu0 0.0
  %787 = vmatpush1.msra.mxu0 0.0
  %788 = vmatprep.subr.mxu0 0.0
  %789 = vmatpush1.msra.mxu0 0.0
  %790 = vmatprep.subr.mxu0 0.0
  %791 = vmatpush1.msra.mxu0 0.0
  %792 = vmatprep.subr.mxu0 0.0
  %793 = vmatpush1.msra.mxu0 0.0
  %794 = vmatprep.subr.mxu0 0.0
  %795 = vmatpush1.msra.mxu0 0.0
  %796 = vmatprep.subr.mxu0 0.0
  %797 = vmatpush1.msra.mxu0 0.0
  %798 = vmatprep.subr.mxu0 0.0
  %799 = vmatpush1.msra.mxu0 0.0
  %800 = vmatprep.subr.mxu0 0.0
  %801 = vmatpush1.msra.mxu0 0.0
  %802 = vmatprep.subr.mxu0 0.0
  %803 = vmatpush1.msra.mxu0 0.0
  %804 = vmatprep.mubr.f32.mxu0 0.0
  %805 = vmatmul.mubr.f32.gmra.mrb[0].mxu0 %v738
  %v806 = vpop.f32.mrb[0].mxu0
  %v807 = vadd.f32 0.0, %v806
  %v808 = vpop.f32.mrb[0].mxu0
  %809 = vdwg.mxu0
  %v810 = vadd.f32 %v200, %v807
  %v811 = vxor.u32 %v810, 2147483648
  %v812 = vmul.f32 %v811, 1.442695
  %v813 = vpow.pop %v812
  %v814 = vadd.f32 %v813, 1.0
  %v815 = vrcp.pop %v814
  %v816 = vmul.f32 1.0, %v815
  %v817 = vadd.f32 %v807, %v305
  %819 = vrot.lane.b32.xlu0 %v817, 64
  %v820 = vpop.permute.xlu0 %819
  %v822 = vmul.f32 %v816, %v820
  %824 = vrot.lane.b32.xlu0 %v822, 64
  %v825 = vpop.permute.xlu0 %824
  %v827 = vadd.f32 %v200, %v825
  %v828 = vtanh.pop %v827
  %v829 = vsub.f32 1.0, %v816
  %831 = vrot.lane.b32.xlu0 %v828, 96
  %v832 = vpop.permute.xlu0 %831
  %v834 = vmul.f32 %v829, %v832
  %v835 = vmul.f32 %v816, %v734
  %v836 = vadd.f32 %v834, %v835
  %838 = vrot.lane.b32.xlu0 %v836, 96
  %v839 = vpop.permute.xlu0 %838
  %v840 = vsel %vm218, %v839, 0
  %842 = vmatprep.subr.mxu0 0.0
  %843 = vmatpush1.msra.mxu0 %v213
  %844 = vmatprep.subr.mxu0 0.0
  %845 = vmatpush1.msra.mxu0 %v214
  %846 = vmatprep.subr.mxu0 0.0
  %847 = vmatpush1.msra.mxu0 %v215
  %848 = vmatprep.subr.mxu0 0.0
  %849 = vmatpush1.msra.mxu0 %v216
  %850 = vmatprep.subr.mxu0 0.0
  %851 = vmatpush1.msra.mxu0 0.0
  %852 = vmatprep.subr.mxu0 0.0
  %853 = vmatpush1.msra.mxu0 0.0
  %854 = vmatprep.subr.mxu0 0.0
  %855 = vmatpush1.msra.mxu0 0.0
  %856 = vmatprep.subr.mxu0 0.0
  %857 = vmatpush1.msra.mxu0 0.0
  %858 = vmatprep.subr.mxu0 0.0
  %859 = vmatpush1.msra.mxu0 0.0
  %860 = vmatprep.subr.mxu0 0.0
  %861 = vmatpush1.msra.mxu0 0.0
  %862 = vmatprep.subr.mxu0 0.0
  %863 = vmatpush1.msra.mxu0 0.0
  %864 = vmatprep.subr.mxu0 0.0
  %865 = vmatpush1.msra.mxu0 0.0
  %866 = vmatprep.subr.mxu0 0.0
  %867 = vmatpush1.msra.mxu0 0.0
  %868 = vmatprep.subr.mxu0 0.0
  %869 = vmatpush1.msra.mxu0 0.0
  %870 = vmatprep.subr.mxu0 0.0
  %871 = vmatpush1.msra.mxu0 0.0
  %872 = vmatprep.subr.mxu0 0.0
  %873 = vmatpush1.msra.mxu0 0.0
  %874 = vmatprep.subr.mxu0 0.0
  %875 = vmatpush1.msra.mxu0 0.0
  %876 = vmatprep.subr.mxu0 0.0
  %877 = vmatpush1.msra.mxu0 0.0
  %878 = vmatprep.subr.mxu0 0.0
  %879 = vmatpush1.msra.mxu0 0.0
  %880 = vmatprep.subr.mxu0 0.0
  %881 = vmatpush1.msra.mxu0 0.0
  %882 = vmatprep.subr.mxu0 0.0
  %883 = vmatpush1.msra.mxu0 0.0
  %884 = vmatprep.subr.mxu0 0.0
  %885 = vmatpush1.msra.mxu0 0.0
  %886 = vmatprep.subr.mxu0 0.0
  %887 = vmatpush1.msra.mxu0 0.0
  %888 = vmatprep.subr.mxu0 0.0
  %889 = vmatpush1.msra.mxu0 0.0
  %890 = vmatprep.subr.mxu0 0.0
  %891 = vmatpush1.msra.mxu0 0.0
  %892 = vmatprep.subr.mxu0 0.0
  %893 = vmatpush1.msra.mxu0 0.0
  %894 = vmatprep.subr.mxu0 0.0
  %895 = vmatpush1.msra.mxu0 0.0
  %896 = vmatprep.subr.mxu0 0.0
  %897 = vmatpush1.msra.mxu0 0.0
  %898 = vmatprep.subr.mxu0 0.0
  %899 = vmatpush1.msra.mxu0 0.0
  %900 = vmatprep.subr.mxu0 0.0
  %901 = vmatpush1.msra.mxu0 0.0
  %902 = vmatprep.subr.mxu0 0.0
  %903 = vmatpush1.msra.mxu0 0.0
  %904 = vmatprep.subr.mxu0 0.0
  %905 = vmatpush1.msra.mxu0 0.0
  %906 = vmatprep.mubr.f32.mxu0 0.0
  %907 = vmatmul.mubr.f32.gmra.mrb[0].mxu0 %v840
  %v908 = vpop.f32.mrb[0].mxu0
  %v909 = vadd.f32 0.0, %v908
  %v910 = vpop.f32.mrb[0].mxu0
  %911 = vdwg.mxu0
  %v912 = vadd.f32 %v205, %v909
  %v913 = vxor.u32 %v912, 2147483648
  %v914 = vmul.f32 %v913, 1.442695
  %v915 = vpow.pop %v914
  %v916 = vadd.f32 %v915, 1.0
  %v917 = vrcp.pop %v916
  %v918 = vmul.f32 1.0, %v917
  %v919 = vadd.f32 %v909, %v305
  %921 = vrot.lane.b32.xlu0 %v919, 64
  %v922 = vpop.permute.xlu0 %921
  %v924 = vmul.f32 %v918, %v922
  %926 = vrot.lane.b32.xlu0 %v924, 64
  %v927 = vpop.permute.xlu0 %926
  %v929 = vadd.f32 %v205, %v927
  %v930 = vtanh.pop %v929
  %v931 = vsub.f32 1.0, %v918
  %933 = vrot.lane.b32.xlu0 %v930, 96
  %v934 = vpop.permute.xlu0 %933
  %v936 = vmul.f32 %v931, %v934
  %v937 = vmul.f32 %v918, %v836
  %v938 = vadd.f32 %v936, %v937
  %940 = vrot.lane.b32.xlu0 %v938, 96
  %v941 = vpop.permute.xlu0 %940
  %v942 = vsel %vm218, %v941, 0
  %944 = vmatprep.subr.mxu0 0.0
  %945 = vmatpush1.msra.mxu0 %v213
  %946 = vmatprep.subr.mxu0 0.0
  %947 = vmatpush1.msra.mxu0 %v214
  %948 = vmatprep.subr.mxu0 0.0
  %949 = vmatpush1.msra.mxu0 %v215
  %950 = vmatprep.subr.mxu0 0.0
  %951 = vmatpush1.msra.mxu0 %v216
  %952 = vmatprep.subr.mxu0 0.0
  %953 = vmatpush1.msra.mxu0 0.0
  %954 = vmatprep.subr.mxu0 0.0
  %955 = vmatpush1.msra.mxu0 0.0
  %956 = vmatprep.subr.mxu0 0.0
  %957 = vmatpush1.msra.mxu0 0.0
  %958 = vmatprep.subr.mxu0 0.0
  %959 = vmatpush1.msra.mxu0 0.0
  %960 = vmatprep.subr.mxu0 0.0
  %961 = vmatpush1.msra.mxu0 0.0
  %962 = vmatprep.subr.mxu0 0.0
  %963 = vmatpush1.msra.mxu0 0.0
  %964 = vmatprep.subr.mxu0 0.0
  %965 = vmatpush1.msra.mxu0 0.0
  %966 = vmatprep.subr.mxu0 0.0
  %967 = vmatpush1.msra.mxu0 0.0
  %968 = vmatprep.subr.mxu0 0.0
  %969 = vmatpush1.msra.mxu0 0.0
  %970 = vmatprep.subr.mxu0 0.0
  %971 = vmatpush1.msra.mxu0 0.0
  %972 = vmatprep.subr.mxu0 0.0
  %973 = vmatpush1.msra.mxu0 0.0
  %974 = vmatprep.subr.mxu0 0.0
  %975 = vmatpush1.msra.mxu0 0.0
  %976 = vmatprep.subr.mxu0 0.0
  %977 = vmatpush1.msra.mxu0 0.0
  %978 = vmatprep.subr.mxu0 0.0
  %979 = vmatpush1.msra.mxu0 0.0
  %980 = vmatprep.subr.mxu0 0.0
  %981 = vmatpush1.msra.mxu0 0.0
  %982 = vmatprep.subr.mxu0 0.0
  %983 = vmatpush1.msra.mxu0 0.0
  %984 = vmatprep.subr.mxu0 0.0
  %985 = vmatpush1.msra.mxu0 0.0
  %986 = vmatprep.subr.mxu0 0.0
  %987 = vmatpush1.msra.mxu0 0.0
  %988 = vmatprep.subr.mxu0 0.0
  %989 = vmatpush1.msra.mxu0 0.0
  %990 = vmatprep.subr.mxu0 0.0
  %991 = vmatpush1.msra.mxu0 0.0
  %992 = vmatprep.subr.mxu0 0.0
  %993 = vmatpush1.msra.mxu0 0.0
  %994 = vmatprep.subr.mxu0 0.0
  %995 = vmatpush1.msra.mxu0 0.0
  %996 = vmatprep.subr.mxu0 0.0
  %997 = vmatpush1.msra.mxu0 0.0
  %998 = vmatprep.subr.mxu0 0.0
  %999 = vmatpush1.msra.mxu0 0.0
  %1000 = vmatprep.subr.mxu0 0.0
  %1001 = vmatpush1.msra.mxu0 0.0
  %1002 = vmatprep.subr.mxu0 0.0
  %1003 = vmatpush1.msra.mxu0 0.0
  %1004 = vmatprep.subr.mxu0 0.0
  %1005 = vmatpush1.msra.mxu0 0.0
  %1006 = vmatprep.subr.mxu0 0.0
  %1007 = vmatpush1.msra.mxu0 0.0
  %1008 = vmatprep.mubr.f32.mxu0 0.0
  %1009 = vmatmul.mubr.f32.gmra.mrb[0].mxu0 %v942
  %v1010 = vpop.f32.mrb[0].mxu0
  %v1011 = vadd.f32 0.0, %v1010
  %v1012 = vpop.f32.mrb[0].mxu0
  %1013 = vdwg.mxu0
  %v1014 = vadd.f32 %v210, %v1011
  %v1015 = vxor.u32 %v1014, 2147483648
  %v1016 = vmul.f32 %v1015, 1.442695
  %v1017 = vpow.pop %v1016
  %v1018 = vadd.f32 %v1017, 1.0
  %v1019 = vrcp.pop %v1018
  %v1020 = vmul.f32 1.0, %v1019
  %v1021 = vadd.f32 %v1011, %v305
  %1023 = vrot.lane.b32.xlu0 %v1021, 64
  %v1024 = vpop.permute.xlu0 %1023
  %v1026 = vmul.f32 %v1020, %v1024
  %1028 = vrot.lane.b32.xlu0 %v1026, 64
  %v1029 = vpop.permute.xlu0 %1028
  %v1031 = vadd.f32 %v210, %v1029
  %v1032 = vtanh.pop %v1031
  %v1033 = vsub.f32 1.0, %v1020
  %1035 = vrot.lane.b32.xlu0 %v1032, 96
  %v1036 = vpop.permute.xlu0 %1035
  %v1038 = vmul.f32 %v1033, %v1036
  %v1039 = vmul.f32 %v1020, %v938
  %v1040 = vadd.f32 %v1038, %v1039
  %v1041 = vld [vmem:[%s4] sm:$0xff]
  %v1042 = vld [vmem:[%s4 + $0x8] sm:$0xff]
  %v1043 = vld [vmem:[%s4 + $0x10] sm:$0xff]
  %v1044 = vld [vmem:[%s4 + $0x18] sm:$0xff]
  %v1045 = vld [vmem:[%s5] sm:$0x1]
  %v1047 = vlaneseq
  %v1048 = vshrl.u32 %v1047, 7
  %v1049 = vsub.s32 0, %v1048
  %v1050 = vrot.slane %v1045, %v1049
  %1053 = vrot.lane.b32.xlu0 %v1040, 96
  %v1054 = vpop.permute.xlu0 %1053
  %v1055 = vsel %vm218, %v1054, 0
  %1057 = vmatprep.subr.mxu0 0.0
  %1058 = vmatpush1.msra.mxu0 %v1041
  %1059 = vmatprep.subr.mxu0 0.0
  %1060 = vmatpush1.msra.mxu0 %v1042
  %1061 = vmatprep.subr.mxu0 0.0
  %1062 = vmatpush1.msra.mxu0 %v1043
  %1063 = vmatprep.subr.mxu0 0.0
  %1064 = vmatpush1.msra.mxu0 %v1044
  %1065 = vmatprep.subr.mxu0 0.0
  %1066 = vmatpush1.msra.mxu0 0.0
  %1067 = vmatprep.subr.mxu0 0.0
  %1068 = vmatpush1.msra.mxu0 0.0
  %1069 = vmatprep.subr.mxu0 0.0
  %1070 = vmatpush1.msra.mxu0 0.0
  %1071 = vmatprep.subr.mxu0 0.0
  %1072 = vmatpush1.msra.mxu0 0.0
  %1073 = vmatprep.subr.mxu0 0.0
  %1074 = vmatpush1.msra.mxu0 0.0
  %1075 = vmatprep.subr.mxu0 0.0
  %1076 = vmatpush1.msra.mxu0 0.0
  %1077 = vmatprep.subr.mxu0 0.0
  %1078 = vmatpush1.msra.mxu0 0.0
  %1079 = vmatprep.subr.mxu0 0.0
  %1080 = vmatpush1.msra.mxu0 0.0
  %1081 = vmatprep.subr.mxu0 0.0
  %1082 = vmatpush1.msra.mxu0 0.0
  %1083 = vmatprep.subr.mxu0 0.0
  %1084 = vmatpush1.msra.mxu0 0.0
  %1085 = vmatprep.subr.mxu0 0.0
  %1086 = vmatpush1.msra.mxu0 0.0
  %1087 = vmatprep.subr.mxu0 0.0
  %1088 = vmatpush1.msra.mxu0 0.0
  %1089 = vmatprep.subr.mxu0 0.0
  %1090 = vmatpush1.msra.mxu0 0.0
  %1091 = vmatprep.subr.mxu0 0.0
  %1092 = vmatpush1.msra.mxu0 0.0
  %1093 = vmatprep.subr.mxu0 0.0
  %1094 = vmatpush1.msra.mxu0 0.0
  %1095 = vmatprep.subr.mxu0 0.0
  %1096 = vmatpush1.msra.mxu0 0.0
  %1097 = vmatprep.subr.mxu0 0.0
  %1098 = vmatpush1.msra.mxu0 0.0
  %1099 = vmatprep.subr.mxu0 0.0
  %1100 = vmatpush1.msra.mxu0 0.0
  %1101 = vmatprep.subr.mxu0 0.0
  %1102 = vmatpush1.msra.mxu0 0.0
  %1103 = vmatprep.subr.mxu0 0.0
  %1104 = vmatpush1.msra.mxu0 0.0
  %1105 = vmatprep.subr.mxu0 0.0
  %1106 = vmatpush1.msra.mxu0 0.0
  %1107 = vmatprep.subr.mxu0 0.0
  %1108 = vmatpush1.msra.mxu0 0.0
  %1109 = vmatprep.subr.mxu0 0.0
  %1110 = vmatpush1.msra.mxu0 0.0
  %1111 = vmatprep.subr.mxu0 0.0
  %1112 = vmatpush1.msra.mxu0 0.0
  %1113 = vmatprep.subr.mxu0 0.0
  %1114 = vmatpush1.msra.mxu0 0.0
  %1115 = vmatprep.subr.mxu0 0.0
  %1116 = vmatpush1.msra.mxu0 0.0
  %1117 = vmatprep.subr.mxu0 0.0
  %1118 = vmatpush1.msra.mxu0 0.0
  %1119 = vmatprep.subr.mxu0 0.0
  %1120 = vmatpush1.msra.mxu0 0.0
  %1121 = vmatprep.mubr.f32.mxu0 0.0
  %1122 = vmatmul.mubr.f32.gmra.mrb[0].mxu0 %v330
  %v1123 = vpop.f32.mrb[0].mxu0
  %v1124 = vadd.f32 %v1050, %v1123
  %v1125 = vpop.f32.mrb[0].mxu0
  %1126 = vmatprep.mubr.f32.mxu0 0.0
  %1127 = vmatmul.mubr.f32.gmra.mrb[0].mxu0 %v432
  %v1128 = vpop.f32.mrb[0].mxu0
  %v1129 = vadd.f32 %v1050, %v1128
  %v1130 = vpop.f32.mrb[0].mxu0
  %1131 = vmatprep.mubr.f32.mxu0 0.0
  %1132 = vmatmul.mubr.f32.gmra.mrb[0].mxu0 %v534
  %v1133 = vpop.f32.mrb[0].mxu0
  %v1134 = vadd.f32 %v1050, %v1133
  %v1135 = vpop.f32.mrb[0].mxu0
  %1136 = vmatprep.mubr.f32.mxu0 0.0
  %1137 = vmatmul.mubr.f32.gmra.mrb[0].mxu0 %v636
  %v1138 = vpop.f32.mrb[0].mxu0
  %v1139 = vadd.f32 %v1050, %v1138
  %v1140 = vpop.f32.mrb[0].mxu0
  %1141 = vmatprep.mubr.f32.mxu0 0.0
  %1142 = vmatmul.mubr.f32.gmra.mrb[0].mxu0 %v738
  %v1143 = vpop.f32.mrb[0].mxu0
  %v1144 = vadd.f32 %v1050, %v1143
  %v1145 = vpop.f32.mrb[0].mxu0
  %1146 = vmatprep.mubr.f32.mxu0 0.0
  %1147 = vmatmul.mubr.f32.gmra.mrb[0].mxu0 %v840
  %v1148 = vpop.f32.mrb[0].mxu0
  %v1149 = vadd.f32 %v1050, %v1148
  %v1150 = vpop.f32.mrb[0].mxu0
  %1151 = vmatprep.mubr.f32.mxu0 0.0
  %1152 = vmatmul.mubr.f32.gmra.mrb[0].mxu0 %v942
  %v1153 = vpop.f32.mrb[0].mxu0
  %v1154 = vadd.f32 %v1050, %v1153
  %v1155 = vpop.f32.mrb[0].mxu0
  %1156 = vmatprep.mubr.f32.mxu0 0.0
  %1157 = vmatmul.mubr.f32.gmra.mrb[0].mxu0 %v1055
  %v1158 = vpop.f32.mrb[0].mxu0
  %v1159 = vadd.f32 %v1050, %v1158
  %v1160 = vpop.f32.mrb[0].mxu0
  %1161 = vdwg.mxu0
  %vm1162 = vcmask 64512
  %v1163 = vsel %vm1162, %v1124, -inf
  %1164 = vmax.xlane.f32.xlu0 %v1163
  %v1165 = vpop.xlane.xlu0 %1164
  %v1166 = vsel %vm1162, %v1129, -inf
  %1167 = vmax.xlane.f32.xlu0 %v1166
  %v1168 = vpop.xlane.xlu0 %1167
  %v1169 = vsel %vm1162, %v1134, -inf
  %1170 = vmax.xlane.f32.xlu0 %v1169
  %v1171 = vpop.xlane.xlu0 %1170
  %v1172 = vsel %vm1162, %v1139, -inf
  %1173 = vmax.xlane.f32.xlu0 %v1172
  %v1174 = vpop.xlane.xlu0 %1173
  %v1175 = vsel %vm1162, %v1144, -inf
  %1176 = vmax.xlane.f32.xlu0 %v1175
  %v1177 = vpop.xlane.xlu0 %1176
  %v1178 = vsel %vm1162, %v1149, -inf
  %1179 = vmax.xlane.f32.xlu0 %v1178
  %v1180 = vpop.xlane.xlu0 %1179
  %v1181 = vsel %vm1162, %v1154, -inf
  %1182 = vmax.xlane.f32.xlu0 %v1181
  %v1183 = vpop.xlane.xlu0 %1182
  %v1184 = vsel %vm1162, %v1159, -inf
  %1185 = vmax.xlane.f32.xlu0 %v1184
  %v1186 = vpop.xlane.xlu0 %1185
  %v1187 = vsub.f32 %v1124, %v1165
  %v1188 = vsub.f32 %v1129, %v1168
  %v1189 = vsub.f32 %v1134, %v1171
  %v1190 = vsub.f32 %v1139, %v1174
  %v1191 = vsub.f32 %v1144, %v1177
  %v1192 = vsub.f32 %v1149, %v1180
  %v1193 = vsub.f32 %v1154, %v1183
  %v1194 = vsub.f32 %v1159, %v1186
  %v1195 = vmul.f32 %v1187, 1.442695
  %v1196 = vpow.pop %v1195
  %v1197 = vmul.f32 %v1188, 1.442695
  %v1198 = vpow.pop %v1197
  %v1199 = vmul.f32 %v1189, 1.442695
  %v1200 = vpow.pop %v1199
  %v1201 = vmul.f32 %v1190, 1.442695
  %v1202 = vpow.pop %v1201
  %v1203 = vmul.f32 %v1191, 1.442695
  %v1204 = vpow.pop %v1203
  %v1205 = vmul.f32 %v1192, 1.442695
  %v1206 = vpow.pop %v1205
  %v1207 = vmul.f32 %v1193, 1.442695
  %v1208 = vpow.pop %v1207
  %v1209 = vmul.f32 %v1194, 1.442695
  %v1210 = vpow.pop %v1209
  %v1211 = vsel %vm1162, %v1196, 0.0
  %1212 = vadd.xlane.f32.xlu0 %v1211
  %v1213 = vpop.xlane.xlu0 %1212
  %v1214 = vsel %vm1162, %v1198, 0.0
  %1215 = vadd.xlane.f32.xlu0 %v1214
  %v1216 = vpop.xlane.xlu0 %1215
  %v1217 = vsel %vm1162, %v1200, 0.0
  %1218 = vadd.xlane.f32.xlu0 %v1217
  %v1219 = vpop.xlane.xlu0 %1218
  %v1220 = vsel %vm1162, %v1202, 0.0
  %1221 = vadd.xlane.f32.xlu0 %v1220
  %v1222 = vpop.xlane.xlu0 %1221
  %v1223 = vsel %vm1162, %v1204, 0.0
  %1224 = vadd.xlane.f32.xlu0 %v1223
  %v1225 = vpop.xlane.xlu0 %1224
  %v1226 = vsel %vm1162, %v1206, 0.0
  %1227 = vadd.xlane.f32.xlu0 %v1226
  %v1228 = vpop.xlane.xlu0 %1227
  %v1229 = vsel %vm1162, %v1208, 0.0
  %1230 = vadd.xlane.f32.xlu0 %v1229
  %v1231 = vpop.xlane.xlu0 %1230
  %v1232 = vsel %vm1162, %v1210, 0.0
  %1233 = vadd.xlane.f32.xlu0 %v1232
  %v1234 = vpop.xlane.xlu0 %1233
  %v1235 = vlog2.pop %v1213
  %v1236 = vmul.f32 %v1235, 0.6931472
  %v1237 = vlog2.pop %v1216
  %v1238 = vmul.f32 %v1237, 0.6931472
  %v1239 = vlog2.pop %v1219
  %v1240 = vmul.f32 %v1239, 0.6931472
  %v1241 = vlog2.pop %v1222
  %v1242 = vmul.f32 %v1241, 0.6931472
  %v1243 = vlog2.pop %v1225
  %v1244 = vmul.f32 %v1243, 0.6931472
  %v1245 = vlog2.pop %v1228
  %v1246 = vmul.f32 %v1245, 0.6931472
  %v1247 = vlog2.pop %v1231
  %v1248 = vmul.f32 %v1247, 0.6931472
  %v1249 = vlog2.pop %v1234
  %v1250 = vmul.f32 %v1249, 0.6931472
  %v1251 = vadd.f32 %v1165, %v1236
  %v1252 = vadd.f32 %v1168, %v1238
  %v1253 = vadd.f32 %v1171, %v1240
  %v1254 = vadd.f32 %v1174, %v1242
  %v1255 = vadd.f32 %v1177, %v1244
  %v1256 = vadd.f32 %v1180, %v1246
  %v1257 = vadd.f32 %v1183, %v1248
  %v1258 = vadd.f32 %v1186, %v1250
  %v1259 = vsub.f32 %v1124, %v1251
  %v1260 = vsub.f32 %v1129, %v1252
  %v1261 = vsub.f32 %v1134, %v1253
  %v1262 = vsub.f32 %v1139, %v1254
  %v1263 = vsub.f32 %v1144, %v1255
  %v1264 = vsub.f32 %v1149, %v1256
  %v1265 = vsub.f32 %v1154, %v1257
  %v1266 = vsub.f32 %v1159, %v1258
  %1267 = vst.msk [vmem:[%s6] sm:$0xff] %vm1162, %v1259
  %1268 = vst.msk [vmem:[%s6 + $0x8] sm:$0xff] %vm1162, %v1260
  %1269 = vst.msk [vmem:[%s6 + $0x10] sm:$0xff] %vm1162, %v1261
  %1270 = vst.msk [vmem:[%s6 + $0x18] sm:$0xff] %vm1162, %v1262
  %1271 = vst.msk [vmem:[%s6 + $0x20] sm:$0xff] %vm1162, %v1263
  %1272 = vst.msk [vmem:[%s6 + $0x28] sm:$0xff] %vm1162, %v1264
  %1273 = vst.msk [vmem:[%s6 + $0x30] sm:$0xff] %vm1162, %v1265
  %1274 = vst.msk [vmem:[%s6 + $0x38] sm:$0xff] %vm1162, %v1266
  // Predicated region
  $region26: #{tpu_custom_call.1} parent=0 // pred_check
    _
  $region27: #{tpu_custom_call.1} parent=0 // pred_check_branch
    %1276 = sbr.rel (0) target = $region29
  $region28: #{tpu_custom_call.1} parent=0 // pred_region
    _
  $region29: #{tpu_custom_call.1} parent=0 // pred_fallthru
    _
  // Predicated region
  $region30: #{tpu_custom_call.1} parent=0 // pred_check
    _
  $region31: #{tpu_custom_call.1} parent=0 // pred_check_branch
    %1278 = sbr.rel (0) target = $region33
  $region32: #{tpu_custom_call.1} parent=0 // pred_region
    _
  $region33: #{tpu_custom_call.1} parent=0 // pred_fallthru
    _

</llo_original>
